<compile_context>
chip_gen: v6e
topology: v6e:2x2x1
jax: 0.10.0
libtpu: 0.0.40
codegen_flags: <defaults>
</compile_context>

<pallas_src>
import functools

import jax
import jax.numpy as jnp
import numpy as np
from jax import lax
from jax.experimental import pallas as pl
from jax.experimental.pallas import tpu as pltpu


def _round_up(x, m):
    return ((x + m - 1) // m) * m


def cg_kernel(fs_ref, fd_ref, src_ref, dst_ref, dst_row_ref, gproj_ref, out_ref):
    i = pl.program_id(1)          # reduction (edge-tile) axis, innermost

    @pl.when(i == 0)
    def _():
        out_ref[...] = jnp.zeros_like(out_ref)

    te = gproj_ref.shape[0]       # edges in this tile
    n = fs_ref.shape[0]           # padded node count
    mxu_dtype = fs_ref.dtype      # bf16 (default) or f32

    # ---- gather-as-matmul: (te, n) one-hots from column-layout indices --------
    node_iota_en = lax.broadcasted_iota(jnp.int32, (te, n), 1)
    # padded edges carry index == n (sentinel) -> all-zero one-hot row -> no contribution
    src_oh = (src_ref[...] == node_iota_en).astype(mxu_dtype)   # src_ref: (te, 1)
    dst_oh = (dst_ref[...] == node_iota_en).astype(mxu_dtype)   # dst_ref: (te, 1)

    # ---- z = fs[src] + fd[dst] + (gdf @ W_gdf + b)   (projections hoisted) -----
    z = (jnp.dot(src_oh, fs_ref[...], preferred_element_type=jnp.float32)
         + jnp.dot(dst_oh, fd_ref[...], preferred_element_type=jnp.float32)
         + gproj_ref[...])

    gate = jax.nn.sigmoid(z)                       # EUP, f32
    act = jnp.where(z > 0.0, z, 0.01 * z)          # VPU, torch LeakyReLU default slope
    msg = (gate * act).astype(mxu_dtype)

    # ---- scatter-sum: build the (n, te) one-hot directly (no XLU transpose) ----
    node_iota_ne = lax.broadcasted_iota(jnp.int32, (n, te), 0)
    scatter_oh = (dst_row_ref[...] == node_iota_ne).astype(mxu_dtype)  # dst_row: (1, te)

    out_ref[...] += jnp.dot(scatter_oh, msg, preferred_element_type=jnp.float32)


def cg_forward(feat, src, dst, gdf, w_t, b, *, edge_tile=256, num_shards=1,
               use_bf16=True, single_buffer_invariants=False):
    """feat:[N,H] f32, src/dst:[E] int32, gdf:[E,B] f32,
       w_t:[2H+B,H] f32 (transposed torch weight), b:[H] f32.

    On v7x: pass num_shards=2 (two TensorCores) and single_buffer_invariants=True."""
    n, h = feat.shape
    e, bfeat = gdf.shape
    assert w_t.shape == (2 * h + bfeat, h)

    n_pad = _round_up(n, 128)
    h_pad = _round_up(h, 128)

    tiles_per_shard = max(1, -(-e // (edge_tile * num_shards)))   # cdiv
    e_pad = num_shards * tiles_per_shard * edge_tile
    pad_e = e_pad - e

    # Hoisted projections (plain XLA matmuls, one-time O(N*H*H) / O(E*B*H) cost).
    fs = feat @ w_t[:h]                 # (n, h)
    fd = feat @ w_t[h:2 * h]            # (n, h)
    gproj = gdf @ w_t[2 * h:] + b       # (e, h), carries the bias

    mxu_dtype = jnp.bfloat16 if use_bf16 else jnp.float32
    mxu_bytes = 2 if use_bf16 else 4

    fs_p = jnp.pad(fs, ((0, n_pad - n), (0, h_pad - h))).astype(mxu_dtype)
    fd_p = jnp.pad(fd, ((0, n_pad - n), (0, h_pad - h))).astype(mxu_dtype)
    # gproj stays f32 (it is only added to z, never an MXU operand); padded edge
    # rows are zero -> their msg is dropped by the all-zero scatter column anyway.
    gproj_p = jnp.pad(gproj, ((0, pad_e), (0, h_pad - h)))

    # Padded edges point at sentinel node index n_pad -> all-zero one-hot rows.
    src_col = jnp.pad(src.astype(jnp.int32), (0, pad_e), constant_values=n_pad)[:, None]
    dst_col = jnp.pad(dst.astype(jnp.int32), (0, pad_e), constant_values=n_pad)[:, None]
    dst_row = jnp.pad(dst.astype(jnp.int32), (0, pad_e), constant_values=n_pad)[None, :]

    tps = tiles_per_shard
    grid = (num_shards, tps)

    # VMEM footprint-based limit (replaces the old fixed 48 MiB request).
    inv_buf = 1 if single_buffer_invariants else 2
    footprint = (
        inv_buf * 2 * n_pad * h_pad * mxu_bytes            # fs, fd (resident)
        + 2 * n_pad * h_pad * 4                            # output accumulator block
        + 2 * (edge_tile * h_pad * 4 + 3 * edge_tile * 4)  # gproj + index tiles (dbl buf)
        + 3 * edge_tile * n_pad * 4                        # one-hot intermediates
        + 2 * edge_tile * h_pad * 4)                       # z / msg intermediates
    vmem_limit = int(min(64 * 1024 * 1024, 2 * footprint + 8 * 1024 * 1024))

    inv_kwargs = ({"pipeline_mode": pl.Buffered(1)}
                  if single_buffer_invariants else {})

    out_part = pl.pallas_call(
        cg_kernel,
        out_shape=jax.ShapeDtypeStruct((num_shards, n_pad, h_pad), jnp.float32),
        grid_spec=pltpu.PrefetchScalarGridSpec(
            num_scalar_prefetch=0,
            grid=grid,
            in_specs=[
                pl.BlockSpec((n_pad, h_pad), lambda s, i: (0, 0), **inv_kwargs),   # fs (resident)
                pl.BlockSpec((n_pad, h_pad), lambda s, i: (0, 0), **inv_kwargs),   # fd (resident)
                pl.BlockSpec((edge_tile, 1), lambda s, i: (s * tps + i, 0)),       # src idx (col)
                pl.BlockSpec((edge_tile, 1), lambda s, i: (s * tps + i, 0)),       # dst idx (col)
                pl.BlockSpec((1, edge_tile), lambda s, i: (0, s * tps + i)),       # dst idx (row, lane-major)
                pl.BlockSpec((edge_tile, h_pad), lambda s, i: (s * tps + i, 0)),   # gproj tile
            ],
            # per-shard partial accumulator; resident across the 'arbitrary' axis
            out_specs=pl.BlockSpec((None, n_pad, h_pad), lambda s, i: (s, 0, 0)),
        ),
        compiler_params=pltpu.CompilerParams(
            dimension_semantics=("parallel", "arbitrary"),
            vmem_limit_bytes=vmem_limit),
    )(fs_p, fd_p, src_col, dst_col, dst_row, gproj_p)

    if num_shards == 1:
        # single TC: no partial-sum pass, just strip padding
        return out_part[0, :n, :h]
    return out_part.sum(axis=0)[:n, :h]


def cg_reference(feat, src, dst, gdf, w_t, b):
    z = jnp.concatenate([feat[src], feat[dst], gdf], axis=-1) @ w_t + b
    msg = jax.nn.sigmoid(z) * jnp.where(z > 0, z, 0.01 * z)
    return jax.ops.segment_sum(msg, dst, num_segments=feat.shape[0])


if __name__ == "__main__":
    # small synthetic graph: N nodes, E directed edges
    N = 16            # nodes
    H = 32            # atom_hidden_feats
    B = 16            # bond_in_feats
    E = 40            # edges

    key = jax.random.PRNGKey(0)
    k_feat, k_gdf, k_src, k_dst, k_w, k_b = jax.random.split(key, 6)

    feat = jax.random.normal(k_feat, (N, H), dtype=jnp.float32)
    gdf = jax.random.normal(k_gdf, (E, B), dtype=jnp.float32)
    src = jax.random.randint(k_src, (E,), 0, N, dtype=jnp.int32)
    dst = jax.random.randint(k_dst, (E,), 0, N, dtype=jnp.int32)

    # torch.nn.Linear(2H+B, H): weight [H, 2H+B], bias [H], uniform(-k, k), k=1/sqrt(fan_in)
    fan_in = 2 * H + B
    bound = 1.0 / np.sqrt(fan_in)
    w_torch = jax.random.uniform(k_w, (H, fan_in), jnp.float32, -bound, bound)
    bias = jax.random.uniform(k_b, (H,), jnp.float32, -bound, bound)
    w_t = w_torch.T                                   # [2H+B, H] so x @ w_t + b

    ref = jax.block_until_ready(cg_reference(feat, src, dst, gdf, w_t, bias))

    # default path: bf16 MXU operands, 1 shard (v5e/v6e single-TC default)
    run_bf16 = jax.jit(functools.partial(cg_forward, use_bf16=True, num_shards=1))
    out_bf16 = jax.block_until_ready(run_bf16(feat, src, dst, gdf, w_t, bias))
    np.testing.assert_allclose(np.asarray(out_bf16), np.asarray(ref), rtol=3e-2, atol=3e-2)

    # f32 MXU operands: bit-tight validation of the kernel structure
    run_f32 = jax.jit(functools.partial(cg_forward, use_bf16=False, num_shards=1))
    out_f32 = jax.block_until_ready(run_f32(feat, src, dst, gdf, w_t, bias))
    np.testing.assert_allclose(np.asarray(out_f32), np.asarray(ref), rtol=1e-5, atol=1e-5)

    # v7x-style path: two edge shards over the 'parallel' axis (megacore-ready)
    run_2s = jax.jit(functools.partial(cg_forward, use_bf16=True, num_shards=2))
    out_2s = jax.block_until_ready(run_2s(feat, src, dst, gdf, w_t, bias))
    np.testing.assert_allclose(np.asarray(out_2s), np.asarray(ref), rtol=3e-2, atol=3e-2)

    print("KERNEL_OK")
</pallas_src>

<mosaic_0001>
module attributes {stable_mosaic.version = 11 : i64} {
  func.func @cg_kernel(%arg0: i32, %arg1: i32, %arg2: memref<128x128xbf16, #tpu.memory_space<vmem>>, %arg3: memref<128x128xbf16, #tpu.memory_space<vmem>>, %arg4: memref<256x1xi32, #tpu.memory_space<vmem>>, %arg5: memref<256x1xi32, #tpu.memory_space<vmem>>, %arg6: memref<1x256xi32, #tpu.memory_space<vmem>>, %arg7: memref<256x128xf32, #tpu.memory_space<vmem>>, %arg8: memref<1x128x128xf32, #tpu.memory_space<vmem>>) attributes {dimension_semantics = [#tpu.dimension_semantics<parallel>, #tpu.dimension_semantics<arbitrary>], iteration_bounds = array<i64: 1, 1>, scalar_prefetch = 0 : i64, scratch_operands = 0 : i64, tpu.core_type = #tpu.core_type<tc>, window_params = [{pipeline_mode = #tpu.pipeline_mode<synchronous>, transform_indices = @transform_0, window_bounds = array<i64: 128, 128>}, {pipeline_mode = #tpu.pipeline_mode<synchronous>, transform_indices = @transform_1, window_bounds = array<i64: 128, 128>}, {transform_indices = @transform_2, window_bounds = array<i64: 256, 1>}, {transform_indices = @transform_3, window_bounds = array<i64: 256, 1>}, {transform_indices = @transform_4, window_bounds = array<i64: 1, 256>}, {transform_indices = @transform_5, window_bounds = array<i64: 256, 128>}, {transform_indices = @transform_6, window_bounds = array<i64: 1, 128, 128>}]} {
    %c0_i32 = arith.constant 0 : i32
    %0 = arith.cmpi eq, %arg1, %c0_i32 : i32
    %1 = arith.extui %0 : i1 to i32
    %c0_i32_0 = arith.constant 0 : i32
    %2 = arith.cmpi ne, %1, %c0_i32_0 : i32
    scf.if %2 {
      %cst_23 = arith.constant 0.000000e+00 : f32
      %49 = vector.broadcast %cst_23 : f32 to vector<128x128xf32>
      %c0_24 = arith.constant 0 : index
      %c0_25 = arith.constant 0 : index
      %c0_26 = arith.constant 0 : index
      %50 = vector.load %arg8[%c0_24, %c0_25, %c0_26] : memref<1x128x128xf32, #tpu.memory_space<vmem>>, vector<1x128x128xf32>
      %51 = vector.shape_cast %50 : vector<1x128x128xf32> to vector<128x128xf32>
      %52 = vector.shape_cast %49 : vector<128x128xf32> to vector<1x128x128xf32>
      tpu.vector_store %arg8[%c0_24, %c0_25, %c0_26], %52 {strides = array<i32>} : memref<1x128x128xf32, #tpu.memory_space<vmem>>, vector<1x128x128xf32>,
    } else {
    }
    %3 = tpu.iota {dimensions = array<i32: 1>} : vector<256x128xi32>
    %c0 = arith.constant 0 : index
    %c0_1 = arith.constant 0 : index
    %4 = vector.load %arg4[%c0, %c0_1] : memref<256x1xi32, #tpu.memory_space<vmem>>, vector<256x1xi32>
    %5 = vector.broadcast %4 : vector<256x1xi32> to vector<256x128xi32>
    %6 = arith.cmpi eq, %5, %3 : vector<256x128xi32>
    %7 = arith.extui %6 : vector<256x128xi1> to vector<256x128xi32>
    %8 = arith.sitofp %7 : vector<256x128xi32> to vector<256x128xf32>
    %9 = arith.truncf %8 : vector<256x128xf32> to vector<256x128xbf16>
    %c0_2 = arith.constant 0 : index
    %c0_3 = arith.constant 0 : index
    %10 = vector.load %arg5[%c0_2, %c0_3] : memref<256x1xi32, #tpu.memory_space<vmem>>, vector<256x1xi32>
    %11 = vector.broadcast %10 : vector<256x1xi32> to vector<256x128xi32>
    %12 = arith.cmpi eq, %11, %3 : vector<256x128xi32>
    %13 = arith.extui %12 : vector<256x128xi1> to vector<256x128xi32>
    %14 = arith.sitofp %13 : vector<256x128xi32> to vector<256x128xf32>
    %15 = arith.truncf %14 : vector<256x128xf32> to vector<256x128xbf16>
    %c0_4 = arith.constant 0 : index
    %c0_5 = arith.constant 0 : index
    %16 = vector.load %arg2[%c0_4, %c0_5] : memref<128x128xbf16, #tpu.memory_space<vmem>>, vector<128x128xbf16>
    %cst = arith.constant dense<0.000000e+00> : vector<256x128xf32>
    %17 = tpu.matmul %9, %16, %cst {dimension_numbers = #tpu.dot_dimension_numbers<[1], [0], [0], [1], [0, 0, 1, 1], [], []>} : vector<256x128xbf16>, vector<128x128xbf16>, vector<256x128xf32> -> vector<256x128xf32>
    %c0_6 = arith.constant 0 : index
    %c0_7 = arith.constant 0 : index
    %18 = vector.load %arg3[%c0_6, %c0_7] : memref<128x128xbf16, #tpu.memory_space<vmem>>, vector<128x128xbf16>
    %cst_8 = arith.constant dense<0.000000e+00> : vector<256x128xf32>
    %19 = tpu.matmul %15, %18, %cst_8 {dimension_numbers = #tpu.dot_dimension_numbers<[1], [0], [0], [1], [0, 0, 1, 1], [], []>} : vector<256x128xbf16>, vector<128x128xbf16>, vector<256x128xf32> -> vector<256x128xf32>
    %20 = arith.addf %17, %19 : vector<256x128xf32>
    %c0_9 = arith.constant 0 : index
    %c0_10 = arith.constant 0 : index
    %21 = vector.load %arg7[%c0_9, %c0_10] : memref<256x128xf32, #tpu.memory_space<vmem>>, vector<256x128xf32>
    %22 = arith.addf %20, %21 : vector<256x128xf32>
    %23 = arith.negf %22 : vector<256x128xf32>
    %24 = math.exp %23 : vector<256x128xf32>
    %cst_11 = arith.constant 1.000000e+00 : f32
    %25 = vector.broadcast %cst_11 : f32 to vector<256x128xf32>
    %26 = arith.addf %25, %24 : vector<256x128xf32>
    %27 = arith.divf %25, %26 : vector<256x128xf32>
    %cst_12 = arith.constant 0.000000e+00 : f32
    %28 = vector.broadcast %cst_12 : f32 to vector<256x128xf32>
    %29 = arith.cmpf ogt, %22, %28 : vector<256x128xf32>
    %cst_13 = arith.constant 0.00999999977 : f32
    %30 = vector.broadcast %cst_13 : f32 to vector<256x128xf32>
    %31 = arith.mulf %30, %22 : vector<256x128xf32>
    %32 = arith.select %29, %22, %31 : vector<256x128xi1>, vector<256x128xf32>
    %33 = arith.mulf %27, %32 : vector<256x128xf32>
    %34 = arith.truncf %33 : vector<256x128xf32> to vector<256x128xbf16>
    %35 = tpu.iota {dimensions = array<i32: 0>} : vector<128x256xi32>
    %c0_14 = arith.constant 0 : index
    %c0_15 = arith.constant 0 : index
    %36 = vector.load %arg6[%c0_14, %c0_15] : memref<1x256xi32, #tpu.memory_space<vmem>>, vector<1x256xi32>
    %37 = vector.broadcast %36 : vector<1x256xi32> to vector<128x256xi32>
    %38 = arith.cmpi eq, %37, %35 : vector<128x256xi32>
    %39 = arith.extui %38 : vector<128x256xi1> to vector<128x256xi32>
    %40 = arith.sitofp %39 : vector<128x256xi32> to vector<128x256xf32>
    %41 = arith.truncf %40 : vector<128x256xf32> to vector<128x256xbf16>
    %c0_16 = arith.constant 0 : index
    %c0_17 = arith.constant 0 : index
    %c0_18 = arith.constant 0 : index
    %42 = vector.load %arg8[%c0_16, %c0_17, %c0_18] : memref<1x128x128xf32, #tpu.memory_space<vmem>>, vector<1x128x128xf32>
    %43 = vector.shape_cast %42 : vector<1x128x128xf32> to vector<128x128xf32>
    %cst_19 = arith.constant dense<0.000000e+00> : vector<128x128xf32>
    %44 = tpu.matmul %41, %34, %cst_19 {dimension_numbers = #tpu.dot_dimension_numbers<[1], [0], [0], [1], [0, 0, 1, 1], [], []>} : vector<128x256xbf16>, vector<256x128xbf16>, vector<128x128xf32> -> vector<128x128xf32>
    %45 = arith.addf %43, %44 : vector<128x128xf32>
    %c0_20 = arith.constant 0 : index
    %c0_21 = arith.constant 0 : index
    %c0_22 = arith.constant 0 : index
    %46 = vector.load %arg8[%c0_20, %c0_21, %c0_22] : memref<1x128x128xf32, #tpu.memory_space<vmem>>, vector<1x128x128xf32>
    %47 = vector.shape_cast %46 : vector<1x128x128xf32> to vector<128x128xf32>
    %48 = vector.shape_cast %45 : vector<128x128xf32> to vector<1x128x128xf32>
    tpu.vector_store %arg8[%c0_20, %c0_21, %c0_22], %48 {strides = array<i32>} : memref<1x128x128xf32, #tpu.memory_space<vmem>>, vector<1x128x128xf32>,
    return
  }
  func.func @transform_0(%arg0: i32, %arg1: i32) -> (i32, i32) {
    %c0_i32 = arith.constant 0 : i32
    %c0_i32_0 = arith.constant 0 : i32
    %c0_i32_1 = arith.constant 0 : i32
    return %c0_i32, %c0_i32_0 : i32, i32
  }
  func.func @transform_1(%arg0: i32, %arg1: i32) -> (i32, i32) {
    %c0_i32 = arith.constant 0 : i32
    %c0_i32_0 = arith.constant 0 : i32
    %c0_i32_1 = arith.constant 0 : i32
    return %c0_i32, %c0_i32_0 : i32, i32
  }
  func.func @transform_2(%arg0: i32, %arg1: i32) -> (i32, i32) {
    %c1_i32 = arith.constant 1 : i32
    %0 = arith.muli %arg0, %c1_i32 : i32
    %1 = arith.addi %0, %arg1 : i32
    %c0_i32 = arith.constant 0 : i32
    %c0_i32_0 = arith.constant 0 : i32
    return %1, %c0_i32 : i32, i32
  }
  func.func @transform_3(%arg0: i32, %arg1: i32) -> (i32, i32) {
    %c1_i32 = arith.constant 1 : i32
    %0 = arith.muli %arg0, %c1_i32 : i32
    %1 = arith.addi %0, %arg1 : i32
    %c0_i32 = arith.constant 0 : i32
    %c0_i32_0 = arith.constant 0 : i32
    return %1, %c0_i32 : i32, i32
  }
  func.func @transform_4(%arg0: i32, %arg1: i32) -> (i32, i32) {
    %c1_i32 = arith.constant 1 : i32
    %0 = arith.muli %arg0, %c1_i32 : i32
    %1 = arith.addi %0, %arg1 : i32
    %c0_i32 = arith.constant 0 : i32
    %c0_i32_0 = arith.constant 0 : i32
    return %c0_i32, %1 : i32, i32
  }
  func.func @transform_5(%arg0: i32, %arg1: i32) -> (i32, i32) {
    %c1_i32 = arith.constant 1 : i32
    %0 = arith.muli %arg0, %c1_i32 : i32
    %1 = arith.addi %0, %arg1 : i32
    %c0_i32 = arith.constant 0 : i32
    %c0_i32_0 = arith.constant 0 : i32
    return %1, %c0_i32 : i32, i32
  }
  func.func @transform_6(%arg0: i32, %arg1: i32) -> (i32, i32, i32) {
    %c0_i32 = arith.constant 0 : i32
    %c0_i32_0 = arith.constant 0 : i32
    %c0_i32_1 = arith.constant 0 : i32
    return %arg0, %c0_i32, %c0_i32_0 : i32, i32, i32
  }
}

</mosaic_0001>

<llo_original>
// kernel: cg_forward.1
$region0: #{cg_forward.1}
  #allocation0 [shape = 'u32[]', space=smem, size = 0x4, offset = 0x4, fixed_abs, tag = 'smem constant byte address 0x4 - core index']
  #allocation1 [shape = 'u32[144,128]{1,0:T(1,128)}', space=vmem, size = 0x12000, scoped, tag = 'internal scratch']
  %s0 = inlined_call_operand.vmem [shape: bf16[128,128], index: 0, kind: input, shape index: {}]
  %s1 = inlined_call_operand.vmem [shape: bf16[128,128], index: 1, kind: input, shape index: {}]
  %s2 = inlined_call_operand.vmem [shape: s32[256,1], index: 2, kind: input, shape index: {}]
  %s3 = inlined_call_operand.vmem [shape: s32[256,1], index: 3, kind: input, shape index: {}]
  %s4 = inlined_call_operand.vmem [shape: s32[1,256], index: 4, kind: input, shape index: {}]
  %s5 = inlined_call_operand.vmem [shape: f32[256,128], index: 5, kind: input, shape index: {}]
  %s6 = inlined_call_operand.vmem [shape: f32[1,128,128], index: 6, kind: output, shape index: {}]
  %s7 = sld [smem:[#allocation0]]
  $region38: #{cg_forward.1} parent=0
    _
  %s9 = ssub.s32 1, %s7
  %s10 = scalar_select 0, %s9, %s7
  // Predicated region
  $region2: #{cg_forward.1} parent=0 // pred_check
    _
  $region3: #{cg_forward.1} parent=0 // pred_check_branch
    %12 = sbr.rel (0) target = $region5
  $region4: #{cg_forward.1} parent=0 // pred_region
    _
  $region5: #{cg_forward.1} parent=0 // pred_fallthru
    _
  // Predicated region
  $region6: #{cg_forward.1} parent=0 // pred_check
    _
  $region7: #{cg_forward.1} parent=0 // pred_check_branch
    %14 = sbr.rel (0) target = $region9
  $region8: #{cg_forward.1} parent=0 // pred_region
    _
  $region9: #{cg_forward.1} parent=0 // pred_fallthru
    _
  // Predicated region
  $region10: #{cg_forward.1} parent=0 // pred_check
    _
  $region11: #{cg_forward.1} parent=0 // pred_check_branch
    %16 = sbr.rel (0) target = $region13
  $region12: #{cg_forward.1} parent=0 // pred_region
    %s17 = sadd.s32 0, 0
    %s18 = smul.u32 32, %s17
    %p19 = scmp.lt.s32.totalorder %s18, 31
    %s20 = scalar_select %p19, %s18, 31
    %s21 = smul.addr %s20, 8
    %s22 = scalar_lea.vmem %s2, %s21
    %s23 = sadd.s32 0, 0
    %s24 = smul.u32 32, %s23
  $region13: #{cg_forward.1} parent=0 // pred_fallthru
    _
  // Predicated region
  $region14: #{cg_forward.1} parent=0 // pred_check
    _
  $region15: #{cg_forward.1} parent=0 // pred_check_branch
    %26 = sbr.rel (0) target = $region17
  $region16: #{cg_forward.1} parent=0 // pred_region
    %s27 = sadd.s32 0, 0
    %s28 = smul.u32 32, %s27
    %p29 = scmp.lt.s32.totalorder %s28, 31
    %s30 = scalar_select %p29, %s28, 31
    %s31 = smul.addr %s30, 8
    %s32 = scalar_lea.vmem %s3, %s31
    %s33 = sadd.s32 0, 0
    %s34 = smul.u32 32, %s33
  $region17: #{cg_forward.1} parent=0 // pred_fallthru
    _
  // Predicated region
  $region18: #{cg_forward.1} parent=0 // pred_check
    _
  $region19: #{cg_forward.1} parent=0 // pred_check_branch
    %36 = sbr.rel (0) target = $region21
  $region20: #{cg_forward.1} parent=0 // pred_region
    %s37 = sadd.s32 0, 0
    %s38 = smul.u32 2, %s37
    %p39 = scmp.lt.s32.totalorder %s38, 1
    %s40 = scalar_select %p39, %s38, 1
    %s41 = scalar_lea.vmem %s4, %s40
    %s42 = sadd.s32 0, 0
    %s43 = smul.u32 2, %s42
  $region21: #{cg_forward.1} parent=0 // pred_fallthru
    _
  // Predicated region
  $region22: #{cg_forward.1} parent=0 // pred_check
    _
  $region23: #{cg_forward.1} parent=0 // pred_check_branch
    %45 = sbr.rel (0) target = $region25
  $region24: #{cg_forward.1} parent=0 // pred_region
    %s46 = sadd.s32 0, 0
    %s47 = smul.u32 32, %s46
    %p48 = scmp.lt.s32.totalorder %s47, 31
    %s49 = scalar_select %p48, %s47, 31
    %s50 = smul.addr %s49, 8
    %s51 = scalar_lea.vmem %s5, %s50
    %s52 = sadd.s32 0, 0
    %s53 = smul.u32 32, %s52
  $region25: #{cg_forward.1} parent=0 // pred_fallthru
    _
  %s54 = sadd.s32 0, 0
  %s55 = smul.u32 32, %s54
  %p56 = scmp.lt.s32.totalorder %s55, 31
  %s57 = scalar_select %p56, %s55, 31
  %s58 = smul.addr %s57, 8
  %s59 = scalar_lea.vmem %s2, %s58
  %s60 = sadd.s32 0, 0
  %s61 = smul.u32 32, %s60
  %p62 = scmp.lt.s32.totalorder %s61, 31
  %s63 = scalar_select %p62, %s61, 31
  %s64 = smul.addr %s63, 8
  %s65 = scalar_lea.vmem %s3, %s64
  %s66 = sadd.s32 0, 0
  %s67 = smul.u32 2, %s66
  %p68 = scmp.lt.s32.totalorder %s67, 1
  %s69 = scalar_select %p68, %s67, 1
  %s70 = scalar_lea.vmem %s4, %s69
  %s71 = sadd.s32 0, 0
  %s72 = smul.u32 32, %s71
  %p73 = scmp.lt.s32.totalorder %s72, 31
  %s74 = scalar_select %p73, %s72, 31
  %s75 = smul.addr %s74, 8
  %s76 = scalar_lea.vmem %s5, %s75
  %s77 = sadd.s32 0, 0
  %s78 = smul.u32 32, %s77
  %p79 = scmp.lt.s32.totalorder %s78, 31
  %s80 = scalar_select %p79, %s78, 31
  %s81 = smul.addr %s80, 8
  %s82 = scalar_lea.vmem %s2, %s81
  %s83 = sadd.s32 0, 0
  %s84 = smul.u32 32, %s83
  %s85 = sadd.s32 0, 0
  %s86 = smul.u32 32, %s85
  %p87 = scmp.lt.s32.totalorder %s86, 31
  %s88 = scalar_select %p87, %s86, 31
  %s89 = smul.addr %s88, 8
  %s90 = scalar_lea.vmem %s3, %s89
  %s91 = sadd.s32 0, 0
  %s92 = smul.u32 32, %s91
  %s93 = sadd.s32 0, 0
  %s94 = smul.u32 2, %s93
  %p95 = scmp.lt.s32.totalorder %s94, 1
  %s96 = scalar_select %p95, %s94, 1
  %s97 = scalar_lea.vmem %s4, %s96
  %s98 = sadd.s32 0, 0
  %s99 = smul.u32 2, %s98
  %s100 = sadd.s32 0, 0
  %s101 = smul.u32 32, %s100
  %p102 = scmp.lt.s32.totalorder %s101, 31
  %s103 = scalar_select %p102, %s101, 31
  %s104 = smul.addr %s103, 8
  %s105 = scalar_lea.vmem %s5, %s104
  %s106 = sadd.s32 0, 0
  %s107 = smul.u32 32, %s106
  %p109 = scmp.eq.s32.totalorder 0, 0
  // Predicated region
  $region26: #{cg_forward.1} parent=0 // pred_check
    %p110 = pneg %p109
  $region27: #{cg_forward.1} parent=0 // pred_check_branch
    %112 = sbr.rel (%p110) target = $region29
  $region28: #{cg_forward.1} parent=0 // pred_region
    %113 = vst [vmem:[%s6] sm:$0xff] 0.0
    %114 = vst [vmem:[%s6 + $0x8] sm:$0xff] 0.0
    %115 = vst [vmem:[%s6 + $0x10] sm:$0xff] 0.0
    %116 = vst [vmem:[%s6 + $0x18] sm:$0xff] 0.0
    %117 = vst [vmem:[%s6 + $0x20] sm:$0xff] 0.0
    %118 = vst [vmem:[%s6 + $0x28] sm:$0xff] 0.0
    %119 = vst [vmem:[%s6 + $0x30] sm:$0xff] 0.0
    %120 = vst [vmem:[%s6 + $0x38] sm:$0xff] 0.0
    %121 = vst [vmem:[%s6 + $0x40] sm:$0xff] 0.0
    %122 = vst [vmem:[%s6 + $0x48] sm:$0xff] 0.0
    %123 = vst [vmem:[%s6 + $0x50] sm:$0xff] 0.0
    %124 = vst [vmem:[%s6 + $0x58] sm:$0xff] 0.0
    %125 = vst [vmem:[%s6 + $0x60] sm:$0xff] 0.0
    %126 = vst [vmem:[%s6 + $0x68] sm:$0xff] 0.0
    %127 = vst [vmem:[%s6 + $0x70] sm:$0xff] 0.0
    %128 = vst [vmem:[%s6 + $0x78] sm:$0xff] 0.0
  $region29: #{cg_forward.1} parent=0 // pred_fallthru
    _
  %v129 = vlaneseq
  %v130 = vand.u32 %v129, 127
  %v131 = vld [vmem:[%s82] sm:$0xff]
  %v132 = vld [vmem:[%s82 + $0x8] sm:$0xff]
  %v133 = vld [vmem:[%s82 + $0x10] sm:$0xff]
  %v134 = vld [vmem:[%s82 + $0x18] sm:$0xff]
  %v135 = vld [vmem:[%s82 + $0x20] sm:$0xff]
  %v136 = vld [vmem:[%s82 + $0x28] sm:$0xff]
  %v137 = vld [vmem:[%s82 + $0x30] sm:$0xff]
  %v138 = vld [vmem:[%s82 + $0x38] sm:$0xff]
  %v139 = vld [vmem:[%s82 + $0x40] sm:$0xff]
  %v140 = vld [vmem:[%s82 + $0x48] sm:$0xff]
  %v141 = vld [vmem:[%s82 + $0x50] sm:$0xff]
  %v142 = vld [vmem:[%s82 + $0x58] sm:$0xff]
  %v143 = vld [vmem:[%s82 + $0x60] sm:$0xff]
  %v144 = vld [vmem:[%s82 + $0x68] sm:$0xff]
  %v145 = vld [vmem:[%s82 + $0x70] sm:$0xff]
  %v146 = vld [vmem:[%s82 + $0x78] sm:$0xff]
  %v147 = vld [vmem:[%s82 + $0x80] sm:$0xff]
  %v148 = vld [vmem:[%s82 + $0x88] sm:$0xff]
  %v149 = vld [vmem:[%s82 + $0x90] sm:$0xff]
  %v150 = vld [vmem:[%s82 + $0x98] sm:$0xff]
  %v151 = vld [vmem:[%s82 + $0xa0] sm:$0xff]
  %v152 = vld [vmem:[%s82 + $0xa8] sm:$0xff]
  %v153 = vld [vmem:[%s82 + $0xb0] sm:$0xff]
  %v154 = vld [vmem:[%s82 + $0xb8] sm:$0xff]
  %v155 = vld [vmem:[%s82 + $0xc0] sm:$0xff]
  %v156 = vld [vmem:[%s82 + $0xc8] sm:$0xff]
  %v157 = vld [vmem:[%s82 + $0xd0] sm:$0xff]
  %v158 = vld [vmem:[%s82 + $0xd8] sm:$0xff]
  %v159 = vld [vmem:[%s82 + $0xe0] sm:$0xff]
  %v160 = vld [vmem:[%s82 + $0xe8] sm:$0xff]
  %v161 = vld [vmem:[%s82 + $0xf0] sm:$0xff]
  %v162 = vld [vmem:[%s82 + $0xf8] sm:$0xff]
  %163 = vset.pattern.permute.xlu0 0
  %164 = vperm.xlu0 %163, %v131
  %v165 = vpop.permute.xlu0 %164
  %166 = vset.pattern.permute.xlu0 0
  %167 = vperm.xlu0 %166, %v132
  %v168 = vpop.permute.xlu0 %167
  %169 = vset.pattern.permute.xlu0 0
  %170 = vperm.xlu0 %169, %v133
  %v171 = vpop.permute.xlu0 %170
  %172 = vset.pattern.permute.xlu0 0
  %173 = vperm.xlu0 %172, %v134
  %v174 = vpop.permute.xlu0 %173
  %175 = vset.pattern.permute.xlu0 0
  %176 = vperm.xlu0 %175, %v135
  %v177 = vpop.permute.xlu0 %176
  %178 = vset.pattern.permute.xlu0 0
  %179 = vperm.xlu0 %178, %v136
  %v180 = vpop.permute.xlu0 %179
  %181 = vset.pattern.permute.xlu0 0
  %182 = vperm.xlu0 %181, %v137
  %v183 = vpop.permute.xlu0 %182
  %184 = vset.pattern.permute.xlu0 0
  %185 = vperm.xlu0 %184, %v138
  %v186 = vpop.permute.xlu0 %185
  %187 = vset.pattern.permute.xlu0 0
  %188 = vperm.xlu0 %187, %v139
  %v189 = vpop.permute.xlu0 %188
  %190 = vset.pattern.permute.xlu0 0
  %191 = vperm.xlu0 %190, %v140
  %v192 = vpop.permute.xlu0 %191
  %193 = vset.pattern.permute.xlu0 0
  %194 = vperm.xlu0 %193, %v141
  %v195 = vpop.permute.xlu0 %194
  %196 = vset.pattern.permute.xlu0 0
  %197 = vperm.xlu0 %196, %v142
  %v198 = vpop.permute.xlu0 %197
  %199 = vset.pattern.permute.xlu0 0
  %200 = vperm.xlu0 %199, %v143
  %v201 = vpop.permute.xlu0 %200
  %202 = vset.pattern.permute.xlu0 0
  %203 = vperm.xlu0 %202, %v144
  %v204 = vpop.permute.xlu0 %203
  %205 = vset.pattern.permute.xlu0 0
  %206 = vperm.xlu0 %205, %v145
  %v207 = vpop.permute.xlu0 %206
  %208 = vset.pattern.permute.xlu0 0
  %209 = vperm.xlu0 %208, %v146
  %v210 = vpop.permute.xlu0 %209
  %211 = vset.pattern.permute.xlu0 0
  %212 = vperm.xlu0 %211, %v147
  %v213 = vpop.permute.xlu0 %212
  %214 = vset.pattern.permute.xlu0 0
  %215 = vperm.xlu0 %214, %v148
  %v216 = vpop.permute.xlu0 %215
  %217 = vset.pattern.permute.xlu0 0
  %218 = vperm.xlu0 %217, %v149
  %v219 = vpop.permute.xlu0 %218
  %220 = vset.pattern.permute.xlu0 0
  %221 = vperm.xlu0 %220, %v150
  %v222 = vpop.permute.xlu0 %221
  %223 = vset.pattern.permute.xlu0 0
  %224 = vperm.xlu0 %223, %v151
  %v225 = vpop.permute.xlu0 %224
  %226 = vset.pattern.permute.xlu0 0
  %227 = vperm.xlu0 %226, %v152
  %v228 = vpop.permute.xlu0 %227
  %229 = vset.pattern.permute.xlu0 0
  %230 = vperm.xlu0 %229, %v153
  %v231 = vpop.permute.xlu0 %230
  %232 = vset.pattern.permute.xlu0 0
  %233 = vperm.xlu0 %232, %v154
  %v234 = vpop.permute.xlu0 %233
  %235 = vset.pattern.permute.xlu0 0
  %236 = vperm.xlu0 %235, %v155
  %v237 = vpop.permute.xlu0 %236
  %238 = vset.pattern.permute.xlu0 0
  %239 = vperm.xlu0 %238, %v156
  %v240 = vpop.permute.xlu0 %239
  %241 = vset.pattern.permute.xlu0 0
  %242 = vperm.xlu0 %241, %v157
  %v243 = vpop.permute.xlu0 %242
  %244 = vset.pattern.permute.xlu0 0
  %245 = vperm.xlu0 %244, %v158
  %v246 = vpop.permute.xlu0 %245
  %247 = vset.pattern.permute.xlu0 0
  %248 = vperm.xlu0 %247, %v159
  %v249 = vpop.permute.xlu0 %248
  %250 = vset.pattern.permute.xlu0 0
  %251 = vperm.xlu0 %250, %v160
  %v252 = vpop.permute.xlu0 %251
  %253 = vset.pattern.permute.xlu0 0
  %254 = vperm.xlu0 %253, %v161
  %v255 = vpop.permute.xlu0 %254
  %256 = vset.pattern.permute.xlu0 0
  %257 = vperm.xlu0 %256, %v162
  %v258 = vpop.permute.xlu0 %257
  %vm259 = vcmp.eq.s32.totalorder %v165, %v130
  %vm260 = vcmp.eq.s32.totalorder %v168, %v130
  %vm261 = vcmp.eq.s32.totalorder %v171, %v130
  %vm262 = vcmp.eq.s32.totalorder %v174, %v130
  %vm263 = vcmp.eq.s32.totalorder %v177, %v130
  %vm264 = vcmp.eq.s32.totalorder %v180, %v130
  %vm265 = vcmp.eq.s32.totalorder %v183, %v130
  %vm266 = vcmp.eq.s32.totalorder %v186, %v130
  %vm267 = vcmp.eq.s32.totalorder %v189, %v130
  %vm268 = vcmp.eq.s32.totalorder %v192, %v130
  %vm269 = vcmp.eq.s32.totalorder %v195, %v130
  %vm270 = vcmp.eq.s32.totalorder %v198, %v130
  %vm271 = vcmp.eq.s32.totalorder %v201, %v130
  %vm272 = vcmp.eq.s32.totalorder %v204, %v130
  %vm273 = vcmp.eq.s32.totalorder %v207, %v130
  %vm274 = vcmp.eq.s32.totalorder %v210, %v130
  %vm275 = vcmp.eq.s32.totalorder %v213, %v130
  %vm276 = vcmp.eq.s32.totalorder %v216, %v130
  %vm277 = vcmp.eq.s32.totalorder %v219, %v130
  %vm278 = vcmp.eq.s32.totalorder %v222, %v130
  %vm279 = vcmp.eq.s32.totalorder %v225, %v130
  %vm280 = vcmp.eq.s32.totalorder %v228, %v130
  %vm281 = vcmp.eq.s32.totalorder %v231, %v130
  %vm282 = vcmp.eq.s32.totalorder %v234, %v130
  %vm283 = vcmp.eq.s32.totalorder %v237, %v130
  %vm284 = vcmp.eq.s32.totalorder %v240, %v130
  %vm285 = vcmp.eq.s32.totalorder %v243, %v130
  %vm286 = vcmp.eq.s32.totalorder %v246, %v130
  %vm287 = vcmp.eq.s32.totalorder %v249, %v130
  %vm288 = vcmp.eq.s32.totalorder %v252, %v130
  %vm289 = vcmp.eq.s32.totalorder %v255, %v130
  %vm290 = vcmp.eq.s32.totalorder %v258, %v130
  %v291 = vsel %vm259, 1, 0
  %v292 = vsel %vm260, 1, 0
  %v293 = vsel %vm261, 1, 0
  %v294 = vsel %vm262, 1, 0
  %v295 = vsel %vm263, 1, 0
  %v296 = vsel %vm264, 1, 0
  %v297 = vsel %vm265, 1, 0
  %v298 = vsel %vm266, 1, 0
  %v299 = vsel %vm267, 1, 0
  %v300 = vsel %vm268, 1, 0
  %v301 = vsel %vm269, 1, 0
  %v302 = vsel %vm270, 1, 0
  %v303 = vsel %vm271, 1, 0
  %v304 = vsel %vm272, 1, 0
  %v305 = vsel %vm273, 1, 0
  %v306 = vsel %vm274, 1, 0
  %v307 = vsel %vm275, 1, 0
  %v308 = vsel %vm276, 1, 0
  %v309 = vsel %vm277, 1, 0
  %v310 = vsel %vm278, 1, 0
  %v311 = vsel %vm279, 1, 0
  %v312 = vsel %vm280, 1, 0
  %v313 = vsel %vm281, 1, 0
  %v314 = vsel %vm282, 1, 0
  %v315 = vsel %vm283, 1, 0
  %v316 = vsel %vm284, 1, 0
  %v317 = vsel %vm285, 1, 0
  %v318 = vsel %vm286, 1, 0
  %v319 = vsel %vm287, 1, 0
  %v320 = vsel %vm288, 1, 0
  %v321 = vsel %vm289, 1, 0
  %v322 = vsel %vm290, 1, 0
  %v323 = vcvt.s32.f32 %v291
  %v324 = vcvt.s32.f32 %v292
  %v325 = vcvt.s32.f32 %v293
  %v326 = vcvt.s32.f32 %v294
  %v327 = vcvt.s32.f32 %v295
  %v328 = vcvt.s32.f32 %v296
  %v329 = vcvt.s32.f32 %v297
  %v330 = vcvt.s32.f32 %v298
  %v331 = vcvt.s32.f32 %v299
  %v332 = vcvt.s32.f32 %v300
  %v333 = vcvt.s32.f32 %v301
  %v334 = vcvt.s32.f32 %v302
  %v335 = vcvt.s32.f32 %v303
  %v336 = vcvt.s32.f32 %v304
  %v337 = vcvt.s32.f32 %v305
  %v338 = vcvt.s32.f32 %v306
  %v339 = vcvt.s32.f32 %v307
  %v340 = vcvt.s32.f32 %v308
  %v341 = vcvt.s32.f32 %v309
  %v342 = vcvt.s32.f32 %v310
  %v343 = vcvt.s32.f32 %v311
  %v344 = vcvt.s32.f32 %v312
  %v345 = vcvt.s32.f32 %v313
  %v346 = vcvt.s32.f32 %v314
  %v347 = vcvt.s32.f32 %v315
  %v348 = vcvt.s32.f32 %v316
  %v349 = vcvt.s32.f32 %v317
  %v350 = vcvt.s32.f32 %v318
  %v351 = vcvt.s32.f32 %v319
  %v352 = vcvt.s32.f32 %v320
  %v353 = vcvt.s32.f32 %v321
  %v354 = vcvt.s32.f32 %v322
  %v355 = vpack.c.bf16 %v324, %v323
  %v356 = vpack.c.bf16 %v326, %v325
  %v357 = vpack.c.bf16 %v328, %v327
  %v358 = vpack.c.bf16 %v330, %v329
  %v359 = vpack.c.bf16 %v332, %v331
  %v360 = vpack.c.bf16 %v334, %v333
  %v361 = vpack.c.bf16 %v336, %v335
  %v362 = vpack.c.bf16 %v338, %v337
  %v363 = vpack.c.bf16 %v340, %v339
  %v364 = vpack.c.bf16 %v342, %v341
  %v365 = vpack.c.bf16 %v344, %v343
  %v366 = vpack.c.bf16 %v346, %v345
  %v367 = vpack.c.bf16 %v348, %v347
  %v368 = vpack.c.bf16 %v350, %v349
  %v369 = vpack.c.bf16 %v352, %v351
  %v370 = vpack.c.bf16 %v354, %v353
  %v371 = vld [vmem:[%s90] sm:$0xff]
  %v372 = vld [vmem:[%s90 + $0x8] sm:$0xff]
  %v373 = vld [vmem:[%s90 + $0x10] sm:$0xff]
  %v374 = vld [vmem:[%s90 + $0x18] sm:$0xff]
  %v375 = vld [vmem:[%s90 + $0x20] sm:$0xff]
  %v376 = vld [vmem:[%s90 + $0x28] sm:$0xff]
  %v377 = vld [vmem:[%s90 + $0x30] sm:$0xff]
  %v378 = vld [vmem:[%s90 + $0x38] sm:$0xff]
  %v379 = vld [vmem:[%s90 + $0x40] sm:$0xff]
  %v380 = vld [vmem:[%s90 + $0x48] sm:$0xff]
  %v381 = vld [vmem:[%s90 + $0x50] sm:$0xff]
  %v382 = vld [vmem:[%s90 + $0x58] sm:$0xff]
  %v383 = vld [vmem:[%s90 + $0x60] sm:$0xff]
  %v384 = vld [vmem:[%s90 + $0x68] sm:$0xff]
  %v385 = vld [vmem:[%s90 + $0x70] sm:$0xff]
  %v386 = vld [vmem:[%s90 + $0x78] sm:$0xff]
  %v387 = vld [vmem:[%s90 + $0x80] sm:$0xff]
  %v388 = vld [vmem:[%s90 + $0x88] sm:$0xff]
  %v389 = vld [vmem:[%s90 + $0x90] sm:$0xff]
  %v390 = vld [vmem:[%s90 + $0x98] sm:$0xff]
  %v391 = vld [vmem:[%s90 + $0xa0] sm:$0xff]
  %v392 = vld [vmem:[%s90 + $0xa8] sm:$0xff]
  %v393 = vld [vmem:[%s90 + $0xb0] sm:$0xff]
  %v394 = vld [vmem:[%s90 + $0xb8] sm:$0xff]
  %v395 = vld [vmem:[%s90 + $0xc0] sm:$0xff]
  %v396 = vld [vmem:[%s90 + $0xc8] sm:$0xff]
  %v397 = vld [vmem:[%s90 + $0xd0] sm:$0xff]
  %v398 = vld [vmem:[%s90 + $0xd8] sm:$0xff]
  %v399 = vld [vmem:[%s90 + $0xe0] sm:$0xff]
  %v400 = vld [vmem:[%s90 + $0xe8] sm:$0xff]
  %v401 = vld [vmem:[%s90 + $0xf0] sm:$0xff]
  %v402 = vld [vmem:[%s90 + $0xf8] sm:$0xff]
  %403 = vset.pattern.permute.xlu0 0
  %404 = vperm.xlu0 %403, %v371
  %v405 = vpop.permute.xlu0 %404
  %406 = vset.pattern.permute.xlu0 0
  %407 = vperm.xlu0 %406, %v372
  %v408 = vpop.permute.xlu0 %407
  %409 = vset.pattern.permute.xlu0 0
  %410 = vperm.xlu0 %409, %v373
  %v411 = vpop.permute.xlu0 %410
  %412 = vset.pattern.permute.xlu0 0
  %413 = vperm.xlu0 %412, %v374
  %v414 = vpop.permute.xlu0 %413
  %415 = vset.pattern.permute.xlu0 0
  %416 = vperm.xlu0 %415, %v375
  %v417 = vpop.permute.xlu0 %416
  %418 = vset.pattern.permute.xlu0 0
  %419 = vperm.xlu0 %418, %v376
  %v420 = vpop.permute.xlu0 %419
  %421 = vset.pattern.permute.xlu0 0
  %422 = vperm.xlu0 %421, %v377
  %v423 = vpop.permute.xlu0 %422
  %424 = vset.pattern.permute.xlu0 0
  %425 = vperm.xlu0 %424, %v378
  %v426 = vpop.permute.xlu0 %425
  %427 = vset.pattern.permute.xlu0 0
  %428 = vperm.xlu0 %427, %v379
  %v429 = vpop.permute.xlu0 %428
  %430 = vset.pattern.permute.xlu0 0
  %431 = vperm.xlu0 %430, %v380
  %v432 = vpop.permute.xlu0 %431
  %433 = vset.pattern.permute.xlu0 0
  %434 = vperm.xlu0 %433, %v381
  %v435 = vpop.permute.xlu0 %434
  %436 = vset.pattern.permute.xlu0 0
  %437 = vperm.xlu0 %436, %v382
  %v438 = vpop.permute.xlu0 %437
  %439 = vset.pattern.permute.xlu0 0
  %440 = vperm.xlu0 %439, %v383
  %v441 = vpop.permute.xlu0 %440
  %442 = vset.pattern.permute.xlu0 0
  %443 = vperm.xlu0 %442, %v384
  %v444 = vpop.permute.xlu0 %443
  %445 = vset.pattern.permute.xlu0 0
  %446 = vperm.xlu0 %445, %v385
  %v447 = vpop.permute.xlu0 %446
  %448 = vset.pattern.permute.xlu0 0
  %449 = vperm.xlu0 %448, %v386
  %v450 = vpop.permute.xlu0 %449
  %451 = vset.pattern.permute.xlu0 0
  %452 = vperm.xlu0 %451, %v387
  %v453 = vpop.permute.xlu0 %452
  %454 = vset.pattern.permute.xlu0 0
  %455 = vperm.xlu0 %454, %v388
  %v456 = vpop.permute.xlu0 %455
  %457 = vset.pattern.permute.xlu0 0
  %458 = vperm.xlu0 %457, %v389
  %v459 = vpop.permute.xlu0 %458
  %460 = vset.pattern.permute.xlu0 0
  %461 = vperm.xlu0 %460, %v390
  %v462 = vpop.permute.xlu0 %461
  %463 = vset.pattern.permute.xlu0 0
  %464 = vperm.xlu0 %463, %v391
  %v465 = vpop.permute.xlu0 %464
  %466 = vset.pattern.permute.xlu0 0
  %467 = vperm.xlu0 %466, %v392
  %v468 = vpop.permute.xlu0 %467
  %469 = vset.pattern.permute.xlu0 0
  %470 = vperm.xlu0 %469, %v393
  %v471 = vpop.permute.xlu0 %470
  %472 = vset.pattern.permute.xlu0 0
  %473 = vperm.xlu0 %472, %v394
  %v474 = vpop.permute.xlu0 %473
  %475 = vset.pattern.permute.xlu0 0
  %476 = vperm.xlu0 %475, %v395
  %v477 = vpop.permute.xlu0 %476
  %478 = vset.pattern.permute.xlu0 0
  %479 = vperm.xlu0 %478, %v396
  %v480 = vpop.permute.xlu0 %479
  %481 = vset.pattern.permute.xlu0 0
  %482 = vperm.xlu0 %481, %v397
  %v483 = vpop.permute.xlu0 %482
  %484 = vset.pattern.permute.xlu0 0
  %485 = vperm.xlu0 %484, %v398
  %v486 = vpop.permute.xlu0 %485
  %487 = vset.pattern.permute.xlu0 0
  %488 = vperm.xlu0 %487, %v399
  %v489 = vpop.permute.xlu0 %488
  %490 = vset.pattern.permute.xlu0 0
  %491 = vperm.xlu0 %490, %v400
  %v492 = vpop.permute.xlu0 %491
  %493 = vset.pattern.permute.xlu0 0
  %494 = vperm.xlu0 %493, %v401
  %v495 = vpop.permute.xlu0 %494
  %496 = vset.pattern.permute.xlu0 0
  %497 = vperm.xlu0 %496, %v402
  %v498 = vpop.permute.xlu0 %497
  %vm499 = vcmp.eq.s32.totalorder %v405, %v130
  %vm500 = vcmp.eq.s32.totalorder %v408, %v130
  %vm501 = vcmp.eq.s32.totalorder %v411, %v130
  %vm502 = vcmp.eq.s32.totalorder %v414, %v130
  %vm503 = vcmp.eq.s32.totalorder %v417, %v130
  %vm504 = vcmp.eq.s32.totalorder %v420, %v130
  %vm505 = vcmp.eq.s32.totalorder %v423, %v130
  %vm506 = vcmp.eq.s32.totalorder %v426, %v130
  %vm507 = vcmp.eq.s32.totalorder %v429, %v130
  %vm508 = vcmp.eq.s32.totalorder %v432, %v130
  %vm509 = vcmp.eq.s32.totalorder %v435, %v130
  %vm510 = vcmp.eq.s32.totalorder %v438, %v130
  %vm511 = vcmp.eq.s32.totalorder %v441, %v130
  %vm512 = vcmp.eq.s32.totalorder %v444, %v130
  %vm513 = vcmp.eq.s32.totalorder %v447, %v130
  %vm514 = vcmp.eq.s32.totalorder %v450, %v130
  %vm515 = vcmp.eq.s32.totalorder %v453, %v130
  %vm516 = vcmp.eq.s32.totalorder %v456, %v130
  %vm517 = vcmp.eq.s32.totalorder %v459, %v130
  %vm518 = vcmp.eq.s32.totalorder %v462, %v130
  %vm519 = vcmp.eq.s32.totalorder %v465, %v130
  %vm520 = vcmp.eq.s32.totalorder %v468, %v130
  %vm521 = vcmp.eq.s32.totalorder %v471, %v130
  %vm522 = vcmp.eq.s32.totalorder %v474, %v130
  %vm523 = vcmp.eq.s32.totalorder %v477, %v130
  %vm524 = vcmp.eq.s32.totalorder %v480, %v130
  %vm525 = vcmp.eq.s32.totalorder %v483, %v130
  %vm526 = vcmp.eq.s32.totalorder %v486, %v130
  %vm527 = vcmp.eq.s32.totalorder %v489, %v130
  %vm528 = vcmp.eq.s32.totalorder %v492, %v130
  %vm529 = vcmp.eq.s32.totalorder %v495, %v130
  %vm530 = vcmp.eq.s32.totalorder %v498, %v130
  %v531 = vsel %vm499, 1, 0
  %v532 = vsel %vm500, 1, 0
  %v533 = vsel %vm501, 1, 0
  %v534 = vsel %vm502, 1, 0
  %v535 = vsel %vm503, 1, 0
  %v536 = vsel %vm504, 1, 0
  %v537 = vsel %vm505, 1, 0
  %v538 = vsel %vm506, 1, 0
  %v539 = vsel %vm507, 1, 0
  %v540 = vsel %vm508, 1, 0
  %v541 = vsel %vm509, 1, 0
  %v542 = vsel %vm510, 1, 0
  %v543 = vsel %vm511, 1, 0
  %v544 = vsel %vm512, 1, 0
  %v545 = vsel %vm513, 1, 0
  %v546 = vsel %vm514, 1, 0
  %v547 = vsel %vm515, 1, 0
  %v548 = vsel %vm516, 1, 0
  %v549 = vsel %vm517, 1, 0
  %v550 = vsel %vm518, 1, 0
  %v551 = vsel %vm519, 1, 0
  %v552 = vsel %vm520, 1, 0
  %v553 = vsel %vm521, 1, 0
  %v554 = vsel %vm522, 1, 0
  %v555 = vsel %vm523, 1, 0
  %v556 = vsel %vm524, 1, 0
  %v557 = vsel %vm525, 1, 0
  %v558 = vsel %vm526, 1, 0
  %v559 = vsel %vm527, 1, 0
  %v560 = vsel %vm528, 1, 0
  %v561 = vsel %vm529, 1, 0
  %v562 = vsel %vm530, 1, 0
  %v563 = vcvt.s32.f32 %v531
  %v564 = vcvt.s32.f32 %v532
  %v565 = vcvt.s32.f32 %v533
  %v566 = vcvt.s32.f32 %v534
  %v567 = vcvt.s32.f32 %v535
  %v568 = vcvt.s32.f32 %v536
  %v569 = vcvt.s32.f32 %v537
  %v570 = vcvt.s32.f32 %v538
  %v571 = vcvt.s32.f32 %v539
  %v572 = vcvt.s32.f32 %v540
  %v573 = vcvt.s32.f32 %v541
  %v574 = vcvt.s32.f32 %v542
  %v575 = vcvt.s32.f32 %v543
  %v576 = vcvt.s32.f32 %v544
  %v577 = vcvt.s32.f32 %v545
  %v578 = vcvt.s32.f32 %v546
  %v579 = vcvt.s32.f32 %v547
  %v580 = vcvt.s32.f32 %v548
  %v581 = vcvt.s32.f32 %v549
  %v582 = vcvt.s32.f32 %v550
  %v583 = vcvt.s32.f32 %v551
  %v584 = vcvt.s32.f32 %v552
  %v585 = vcvt.s32.f32 %v553
  %v586 = vcvt.s32.f32 %v554
  %v587 = vcvt.s32.f32 %v555
  %v588 = vcvt.s32.f32 %v556
  %v589 = vcvt.s32.f32 %v557
  %v590 = vcvt.s32.f32 %v558
  %v591 = vcvt.s32.f32 %v559
  %v592 = vcvt.s32.f32 %v560
  %v593 = vcvt.s32.f32 %v561
  %v594 = vcvt.s32.f32 %v562
  %v595 = vpack.c.bf16 %v564, %v563
  %v596 = vpack.c.bf16 %v566, %v565
  %v597 = vpack.c.bf16 %v568, %v567
  %v598 = vpack.c.bf16 %v570, %v569
  %v599 = vpack.c.bf16 %v572, %v571
  %v600 = vpack.c.bf16 %v574, %v573
  %v601 = vpack.c.bf16 %v576, %v575
  %v602 = vpack.c.bf16 %v578, %v577
  %v603 = vpack.c.bf16 %v580, %v579
  %v604 = vpack.c.bf16 %v582, %v581
  %v605 = vpack.c.bf16 %v584, %v583
  %v606 = vpack.c.bf16 %v586, %v585
  %v607 = vpack.c.bf16 %v588, %v587
  %v608 = vpack.c.bf16 %v590, %v589
  %v609 = vpack.c.bf16 %v592, %v591
  %v610 = vpack.c.bf16 %v594, %v593
  %v611 = vld [vmem:[%s0] sm:$0xf]
  %v612 = vld [vmem:[%s0 + $0x4] sm:$0xf]
  %v613 = vld [vmem:[%s0 + $0x8] sm:$0xf]
  %v614 = vld [vmem:[%s0 + $0xc] sm:$0xf]
  %v615 = vld [vmem:[%s0 + $0x10] sm:$0xf]
  %v616 = vld [vmem:[%s0 + $0x14] sm:$0xf]
  %v617 = vld [vmem:[%s0 + $0x18] sm:$0xf]
  %v618 = vld [vmem:[%s0 + $0x1c] sm:$0xf]
  %v619 = vld [vmem:[%s0 + $0x20] sm:$0xf]
  %v620 = vld [vmem:[%s0 + $0x24] sm:$0xf]
  %v621 = vld [vmem:[%s0 + $0x28] sm:$0xf]
  %v622 = vld [vmem:[%s0 + $0x2c] sm:$0xf]
  %v623 = vld [vmem:[%s0 + $0x30] sm:$0xf]
  %v624 = vld [vmem:[%s0 + $0x34] sm:$0xf]
  %v625 = vld [vmem:[%s0 + $0x38] sm:$0xf]
  %v626 = vld [vmem:[%s0 + $0x3c] sm:$0xf]
  %v627 = vld [vmem:[%s1] sm:$0xf]
  %v628 = vld [vmem:[%s1 + $0x4] sm:$0xf]
  %v629 = vld [vmem:[%s1 + $0x8] sm:$0xf]
  %v630 = vld [vmem:[%s1 + $0xc] sm:$0xf]
  %v631 = vld [vmem:[%s1 + $0x10] sm:$0xf]
  %v632 = vld [vmem:[%s1 + $0x14] sm:$0xf]
  %v633 = vld [vmem:[%s1 + $0x18] sm:$0xf]
  %v634 = vld [vmem:[%s1 + $0x1c] sm:$0xf]
  %v635 = vld [vmem:[%s1 + $0x20] sm:$0xf]
  %v636 = vld [vmem:[%s1 + $0x24] sm:$0xf]
  %v637 = vld [vmem:[%s1 + $0x28] sm:$0xf]
  %v638 = vld [vmem:[%s1 + $0x2c] sm:$0xf]
  %v639 = vld [vmem:[%s1 + $0x30] sm:$0xf]
  %v640 = vld [vmem:[%s1 + $0x34] sm:$0xf]
  %v641 = vld [vmem:[%s1 + $0x38] sm:$0xf]
  %v642 = vld [vmem:[%s1 + $0x3c] sm:$0xf]
  %v659 = vunpack.c.l.b16 %v627
  %v660 = vunpack.c.l.b16 %v628
  %v661 = vunpack.c.l.b16 %v629
  %v662 = vunpack.c.l.b16 %v630
  %v663 = vunpack.c.l.b16 %v631
  %v664 = vunpack.c.l.b16 %v632
  %v665 = vunpack.c.l.b16 %v633
  %v666 = vunpack.c.l.b16 %v634
  %v667 = vunpack.c.l.b16 %v635
  %v668 = vunpack.c.l.b16 %v636
  %v669 = vunpack.c.l.b16 %v637
  %v670 = vunpack.c.l.b16 %v638
  %v671 = vunpack.c.l.b16 %v639
  %v672 = vunpack.c.l.b16 %v640
  %v673 = vunpack.c.l.b16 %v641
  %v674 = vunpack.c.l.b16 %v642
  %v675 = vpack.c.b16 %v660, %v659
  %v676 = vpack.c.b16 %v662, %v661
  %v677 = vpack.c.b16 %v664, %v663
  %v678 = vpack.c.b16 %v666, %v665
  %v679 = vpack.c.b16 %v668, %v667
  %v680 = vpack.c.b16 %v670, %v669
  %v681 = vpack.c.b16 %v672, %v671
  %v682 = vpack.c.b16 %v674, %v673
  %691 = vmatprep.subr.bf16.mxu0 0
  %692 = vmatpush1.bf16.msra.mxu0 %v682
  %693 = vmatprep.subr.bf16.mxu0 0
  %694 = vmatpush1.bf16.msra.mxu0 %v681
  %695 = vmatprep.subr.bf16.mxu0 0
  %696 = vmatpush1.bf16.msra.mxu0 %v680
  %697 = vmatprep.subr.bf16.mxu0 0
  %698 = vmatpush1.bf16.msra.mxu0 %v679
  %699 = vmatprep.subr.bf16.mxu0 0
  %700 = vmatpush1.bf16.msra.mxu0 %v678
  %701 = vmatprep.subr.bf16.mxu0 0
  %702 = vmatpush1.bf16.msra.mxu0 %v677
  %703 = vmatprep.subr.bf16.mxu0 0
  %704 = vmatpush1.bf16.msra.mxu0 %v676
  %705 = vmatprep.subr.bf16.mxu0 0
  %706 = vmatpush1.bf16.msra.mxu0 %v675
  %707 = vmatprep.subr.bf16.mxu0 0
  %708 = vmatpush2.bf16.msra.mxu0 0
  %709 = vmatprep.subr.bf16.mxu0 0
  %710 = vmatpush2.bf16.msra.mxu0 0
  %711 = vmatprep.subr.bf16.mxu0 0
  %712 = vmatpush2.bf16.msra.mxu0 0
  %713 = vmatprep.subr.bf16.mxu0 0
  %714 = vmatpush2.bf16.msra.mxu0 0
  %715 = vmatprep.subr.bf16.mxu0 0
  %716 = vmatpush2.bf16.msra.mxu0 0
  %717 = vmatprep.subr.bf16.mxu0 0
  %718 = vmatpush2.bf16.msra.mxu0 0
  %719 = vmatprep.subr.bf16.mxu0 0
  %720 = vmatpush2.bf16.msra.mxu0 0
  %721 = vmatprep.subr.bf16.mxu0 0
  %722 = vmatpush2.bf16.msra.mxu0 0
  %723 = vmatprep.mubr.bf16.mxu0 0
  %724 = vmatmul.mubr.bf16.gmra.mxu0 %v595
  %v725 = vpop.f32.mrf.mxu0
  %v726 = vadd.f32 0.0, %v725
  %v727 = vpop.f32.mrf.mxu0
  %v728 = vpop.f32.mrf.mxu0
  %v729 = vadd.f32 0.0, %v728
  %v730 = vpop.f32.mrf.mxu0
  %731 = vmatprep.mubr.bf16.mxu0 0
  %732 = vmatmul.mubr.bf16.gmra.mxu0 %v596
  %v733 = vpop.f32.mrf.mxu0
  %v734 = vadd.f32 0.0, %v733
  %v735 = vpop.f32.mrf.mxu0
  %v736 = vpop.f32.mrf.mxu0
  %v737 = vadd.f32 0.0, %v736
  %v738 = vpop.f32.mrf.mxu0
  %739 = vmatprep.mubr.bf16.mxu0 0
  %740 = vmatmul.mubr.bf16.gmra.mxu0 %v597
  %v741 = vpop.f32.mrf.mxu0
  %v742 = vadd.f32 0.0, %v741
  %v743 = vpop.f32.mrf.mxu0
  %v744 = vpop.f32.mrf.mxu0
  %v745 = vadd.f32 0.0, %v744
  %v746 = vpop.f32.mrf.mxu0
  %747 = vmatprep.mubr.bf16.mxu0 0
  %748 = vmatmul.mubr.bf16.gmra.mxu0 %v598
  %v749 = vpop.f32.mrf.mxu0
  %v750 = vadd.f32 0.0, %v749
  %v751 = vpop.f32.mrf.mxu0
  %v752 = vpop.f32.mrf.mxu0
  %v753 = vadd.f32 0.0, %v752
  %v754 = vpop.f32.mrf.mxu0
  %755 = vmatprep.mubr.bf16.mxu0 0
  %756 = vmatmul.mubr.bf16.gmra.mxu0 %v599
  %v757 = vpop.f32.mrf.mxu0
  %v758 = vadd.f32 0.0, %v757
  %v759 = vpop.f32.mrf.mxu0
  %v760 = vpop.f32.mrf.mxu0
  %v761 = vadd.f32 0.0, %v760
  %v762 = vpop.f32.mrf.mxu0
  %763 = vmatprep.mubr.bf16.mxu0 0
  %764 = vmatmul.mubr.bf16.gmra.mxu0 %v600
  %v765 = vpop.f32.mrf.mxu0
  %v766 = vadd.f32 0.0, %v765
  %v767 = vpop.f32.mrf.mxu0
  %v768 = vpop.f32.mrf.mxu0
  %v769 = vadd.f32 0.0, %v768
  %v770 = vpop.f32.mrf.mxu0
  %771 = vmatprep.mubr.bf16.mxu0 0
  %772 = vmatmul.mubr.bf16.gmra.mxu0 %v601
  %v773 = vpop.f32.mrf.mxu0
  %v774 = vadd.f32 0.0, %v773
  %v775 = vpop.f32.mrf.mxu0
  %v776 = vpop.f32.mrf.mxu0
  %v777 = vadd.f32 0.0, %v776
  %v778 = vpop.f32.mrf.mxu0
  %779 = vmatprep.mubr.bf16.mxu0 0
  %780 = vmatmul.mubr.bf16.gmra.mxu0 %v602
  %v781 = vpop.f32.mrf.mxu0
  %v782 = vadd.f32 0.0, %v781
  %v783 = vpop.f32.mrf.mxu0
  %v784 = vpop.f32.mrf.mxu0
  %v785 = vadd.f32 0.0, %v784
  %v786 = vpop.f32.mrf.mxu0
  %787 = vmatprep.mubr.bf16.mxu0 0
  %788 = vmatmul.mubr.bf16.gmra.mxu0 %v603
  %v789 = vpop.f32.mrf.mxu0
  %v790 = vadd.f32 0.0, %v789
  %v791 = vpop.f32.mrf.mxu0
  %v792 = vpop.f32.mrf.mxu0
  %v793 = vadd.f32 0.0, %v792
  %v794 = vpop.f32.mrf.mxu0
  %795 = vmatprep.mubr.bf16.mxu0 0
  %796 = vmatmul.mubr.bf16.gmra.mxu0 %v604
  %v797 = vpop.f32.mrf.mxu0
  %v798 = vadd.f32 0.0, %v797
  %v799 = vpop.f32.mrf.mxu0
  %v800 = vpop.f32.mrf.mxu0
  %v801 = vadd.f32 0.0, %v800
  %v802 = vpop.f32.mrf.mxu0
  %803 = vmatprep.mubr.bf16.mxu0 0
  %804 = vmatmul.mubr.bf16.gmra.mxu0 %v605
  %v805 = vpop.f32.mrf.mxu0
  %v806 = vadd.f32 0.0, %v805
  %v807 = vpop.f32.mrf.mxu0
  %v808 = vpop.f32.mrf.mxu0
  %v809 = vadd.f32 0.0, %v808
  %v810 = vpop.f32.mrf.mxu0
  %811 = vmatprep.mubr.bf16.mxu0 0
  %812 = vmatmul.mubr.bf16.gmra.mxu0 %v606
  %v813 = vpop.f32.mrf.mxu0
  %v814 = vadd.f32 0.0, %v813
  %v815 = vpop.f32.mrf.mxu0
  %v816 = vpop.f32.mrf.mxu0
  %v817 = vadd.f32 0.0, %v816
  %v818 = vpop.f32.mrf.mxu0
  %819 = vmatprep.mubr.bf16.mxu0 0
  %820 = vmatmul.mubr.bf16.gmra.mxu0 %v607
  %v821 = vpop.f32.mrf.mxu0
  %v822 = vadd.f32 0.0, %v821
  %v823 = vpop.f32.mrf.mxu0
  %v824 = vpop.f32.mrf.mxu0
  %v825 = vadd.f32 0.0, %v824
  %v826 = vpop.f32.mrf.mxu0
  %827 = vmatprep.mubr.bf16.mxu0 0
  %828 = vmatmul.mubr.bf16.gmra.mxu0 %v608
  %v829 = vpop.f32.mrf.mxu0
  %v830 = vadd.f32 0.0, %v829
  %v831 = vpop.f32.mrf.mxu0
  %v832 = vpop.f32.mrf.mxu0
  %v833 = vadd.f32 0.0, %v832
  %v834 = vpop.f32.mrf.mxu0
  %835 = vmatprep.mubr.bf16.mxu0 0
  %836 = vmatmul.mubr.bf16.gmra.mxu0 %v609
  %v837 = vpop.f32.mrf.mxu0
  %v838 = vadd.f32 0.0, %v837
  %v839 = vpop.f32.mrf.mxu0
  %v840 = vpop.f32.mrf.mxu0
  %v841 = vadd.f32 0.0, %v840
  %v842 = vpop.f32.mrf.mxu0
  %843 = vmatprep.mubr.bf16.mxu0 0
  %844 = vmatmul.mubr.bf16.gmra.mxu0 %v610
  %v845 = vpop.f32.mrf.mxu0
  %v846 = vadd.f32 0.0, %v845
  %v847 = vpop.f32.mrf.mxu0
  %v848 = vpop.f32.mrf.mxu0
  %v849 = vadd.f32 0.0, %v848
  %v850 = vpop.f32.mrf.mxu0
  %851 = vdwg.mxu0
  %v868 = vunpack.c.l.b16 %v611
  %v869 = vunpack.c.l.b16 %v612
  %v870 = vunpack.c.l.b16 %v613
  %v871 = vunpack.c.l.b16 %v614
  %v872 = vunpack.c.l.b16 %v615
  %v873 = vunpack.c.l.b16 %v616
  %v874 = vunpack.c.l.b16 %v617
  %v875 = vunpack.c.l.b16 %v618
  %v876 = vunpack.c.l.b16 %v619
  %v877 = vunpack.c.l.b16 %v620
  %v878 = vunpack.c.l.b16 %v621
  %v879 = vunpack.c.l.b16 %v622
  %v880 = vunpack.c.l.b16 %v623
  %v881 = vunpack.c.l.b16 %v624
  %v882 = vunpack.c.l.b16 %v625
  %v883 = vunpack.c.l.b16 %v626
  %v884 = vpack.c.b16 %v869, %v868
  %v885 = vpack.c.b16 %v871, %v870
  %v886 = vpack.c.b16 %v873, %v872
  %v887 = vpack.c.b16 %v875, %v874
  %v888 = vpack.c.b16 %v877, %v876
  %v889 = vpack.c.b16 %v879, %v878
  %v890 = vpack.c.b16 %v881, %v880
  %v891 = vpack.c.b16 %v883, %v882
  %900 = vmatprep.subr.bf16.mxu0 0
  %901 = vmatpush1.bf16.msra.mxu0 %v891
  %902 = vmatprep.subr.bf16.mxu0 0
  %903 = vmatpush1.bf16.msra.mxu0 %v890
  %904 = vmatprep.subr.bf16.mxu0 0
  %905 = vmatpush1.bf16.msra.mxu0 %v889
  %906 = vmatprep.subr.bf16.mxu0 0
  %907 = vmatpush1.bf16.msra.mxu0 %v888
  %908 = vmatprep.subr.bf16.mxu0 0
  %909 = vmatpush1.bf16.msra.mxu0 %v887
  %910 = vmatprep.subr.bf16.mxu0 0
  %911 = vmatpush1.bf16.msra.mxu0 %v886
  %912 = vmatprep.subr.bf16.mxu0 0
  %913 = vmatpush1.bf16.msra.mxu0 %v885
  %914 = vmatprep.subr.bf16.mxu0 0
  %915 = vmatpush1.bf16.msra.mxu0 %v884
  %916 = vmatprep.subr.bf16.mxu0 0
  %917 = vmatpush2.bf16.msra.mxu0 0
  %918 = vmatprep.subr.bf16.mxu0 0
  %919 = vmatpush2.bf16.msra.mxu0 0
  %920 = vmatprep.subr.bf16.mxu0 0
  %921 = vmatpush2.bf16.msra.mxu0 0
  %922 = vmatprep.subr.bf16.mxu0 0
  %923 = vmatpush2.bf16.msra.mxu0 0
  %924 = vmatprep.subr.bf16.mxu0 0
  %925 = vmatpush2.bf16.msra.mxu0 0
  %926 = vmatprep.subr.bf16.mxu0 0
  %927 = vmatpush2.bf16.msra.mxu0 0
  %928 = vmatprep.subr.bf16.mxu0 0
  %929 = vmatpush2.bf16.msra.mxu0 0
  %930 = vmatprep.subr.bf16.mxu0 0
  %931 = vmatpush2.bf16.msra.mxu0 0
  %932 = vmatprep.mubr.bf16.mxu0 0
  %933 = vmatmul.mubr.bf16.gmra.mxu0 %v355
  %v934 = vpop.f32.mrf.mxu0
  %v935 = vadd.f32 %v726, %v934
  %v936 = vpop.f32.mrf.mxu0
  %v937 = vpop.f32.mrf.mxu0
  %v938 = vadd.f32 %v729, %v937
  %v939 = vpop.f32.mrf.mxu0
  %940 = vmatprep.mubr.bf16.mxu0 0
  %941 = vmatmul.mubr.bf16.gmra.mxu0 %v356
  %v942 = vpop.f32.mrf.mxu0
  %v943 = vadd.f32 %v734, %v942
  %v944 = vpop.f32.mrf.mxu0
  %v945 = vpop.f32.mrf.mxu0
  %v946 = vadd.f32 %v737, %v945
  %v947 = vpop.f32.mrf.mxu0
  %948 = vmatprep.mubr.bf16.mxu0 0
  %949 = vmatmul.mubr.bf16.gmra.mxu0 %v357
  %v950 = vpop.f32.mrf.mxu0
  %v951 = vadd.f32 %v742, %v950
  %v952 = vpop.f32.mrf.mxu0
  %v953 = vpop.f32.mrf.mxu0
  %v954 = vadd.f32 %v745, %v953
  %v955 = vpop.f32.mrf.mxu0
  %956 = vmatprep.mubr.bf16.mxu0 0
  %957 = vmatmul.mubr.bf16.gmra.mxu0 %v358
  %v958 = vpop.f32.mrf.mxu0
  %v959 = vadd.f32 %v750, %v958
  %v960 = vpop.f32.mrf.mxu0
  %v961 = vpop.f32.mrf.mxu0
  %v962 = vadd.f32 %v753, %v961
  %v963 = vpop.f32.mrf.mxu0
  %964 = vmatprep.mubr.bf16.mxu0 0
  %965 = vmatmul.mubr.bf16.gmra.mxu0 %v359
  %v966 = vpop.f32.mrf.mxu0
  %v967 = vadd.f32 %v758, %v966
  %v968 = vpop.f32.mrf.mxu0
  %v969 = vpop.f32.mrf.mxu0
  %v970 = vadd.f32 %v761, %v969
  %v971 = vpop.f32.mrf.mxu0
  %972 = vmatprep.mubr.bf16.mxu0 0
  %973 = vmatmul.mubr.bf16.gmra.mxu0 %v360
  %v974 = vpop.f32.mrf.mxu0
  %v975 = vadd.f32 %v766, %v974
  %v976 = vpop.f32.mrf.mxu0
  %v977 = vpop.f32.mrf.mxu0
  %v978 = vadd.f32 %v769, %v977
  %v979 = vpop.f32.mrf.mxu0
  %980 = vmatprep.mubr.bf16.mxu0 0
  %981 = vmatmul.mubr.bf16.gmra.mxu0 %v361
  %v982 = vpop.f32.mrf.mxu0
  %v983 = vadd.f32 %v774, %v982
  %v984 = vpop.f32.mrf.mxu0
  %v985 = vpop.f32.mrf.mxu0
  %v986 = vadd.f32 %v777, %v985
  %v987 = vpop.f32.mrf.mxu0
  %988 = vmatprep.mubr.bf16.mxu0 0
  %989 = vmatmul.mubr.bf16.gmra.mxu0 %v362
  %v990 = vpop.f32.mrf.mxu0
  %v991 = vadd.f32 %v782, %v990
  %v992 = vpop.f32.mrf.mxu0
  %v993 = vpop.f32.mrf.mxu0
  %v994 = vadd.f32 %v785, %v993
  %v995 = vpop.f32.mrf.mxu0
  %996 = vmatprep.mubr.bf16.mxu0 0
  %997 = vmatmul.mubr.bf16.gmra.mxu0 %v363
  %v998 = vpop.f32.mrf.mxu0
  %v999 = vadd.f32 %v790, %v998
  %v1000 = vpop.f32.mrf.mxu0
  %v1001 = vpop.f32.mrf.mxu0
  %v1002 = vadd.f32 %v793, %v1001
  %v1003 = vpop.f32.mrf.mxu0
  %1004 = vmatprep.mubr.bf16.mxu0 0
  %1005 = vmatmul.mubr.bf16.gmra.mxu0 %v364
  %v1006 = vpop.f32.mrf.mxu0
  %v1007 = vadd.f32 %v798, %v1006
  %v1008 = vpop.f32.mrf.mxu0
  %v1009 = vpop.f32.mrf.mxu0
  %v1010 = vadd.f32 %v801, %v1009
  %v1011 = vpop.f32.mrf.mxu0
  %1012 = vmatprep.mubr.bf16.mxu0 0
  %1013 = vmatmul.mubr.bf16.gmra.mxu0 %v365
  %v1014 = vpop.f32.mrf.mxu0
  %v1015 = vadd.f32 %v806, %v1014
  %v1016 = vpop.f32.mrf.mxu0
  %v1017 = vpop.f32.mrf.mxu0
  %v1018 = vadd.f32 %v809, %v1017
  %v1019 = vpop.f32.mrf.mxu0
  %1020 = vmatprep.mubr.bf16.mxu0 0
  %1021 = vmatmul.mubr.bf16.gmra.mxu0 %v366
  %v1022 = vpop.f32.mrf.mxu0
  %v1023 = vadd.f32 %v814, %v1022
  %v1024 = vpop.f32.mrf.mxu0
  %v1025 = vpop.f32.mrf.mxu0
  %v1026 = vadd.f32 %v817, %v1025
  %v1027 = vpop.f32.mrf.mxu0
  %1028 = vmatprep.mubr.bf16.mxu0 0
  %1029 = vmatmul.mubr.bf16.gmra.mxu0 %v367
  %v1030 = vpop.f32.mrf.mxu0
  %v1031 = vadd.f32 %v822, %v1030
  %v1032 = vpop.f32.mrf.mxu0
  %v1033 = vpop.f32.mrf.mxu0
  %v1034 = vadd.f32 %v825, %v1033
  %v1035 = vpop.f32.mrf.mxu0
  %1036 = vmatprep.mubr.bf16.mxu0 0
  %1037 = vmatmul.mubr.bf16.gmra.mxu0 %v368
  %v1038 = vpop.f32.mrf.mxu0
  %v1039 = vadd.f32 %v830, %v1038
  %v1040 = vpop.f32.mrf.mxu0
  %v1041 = vpop.f32.mrf.mxu0
  %v1042 = vadd.f32 %v833, %v1041
  %v1043 = vpop.f32.mrf.mxu0
  %1044 = vmatprep.mubr.bf16.mxu0 0
  %1045 = vmatmul.mubr.bf16.gmra.mxu0 %v369
  %v1046 = vpop.f32.mrf.mxu0
  %v1047 = vadd.f32 %v838, %v1046
  %v1048 = vpop.f32.mrf.mxu0
  %v1049 = vpop.f32.mrf.mxu0
  %v1050 = vadd.f32 %v841, %v1049
  %v1051 = vpop.f32.mrf.mxu0
  %1052 = vmatprep.mubr.bf16.mxu0 0
  %1053 = vmatmul.mubr.bf16.gmra.mxu0 %v370
  %v1054 = vpop.f32.mrf.mxu0
  %v1055 = vadd.f32 %v846, %v1054
  %v1056 = vpop.f32.mrf.mxu0
  %v1057 = vpop.f32.mrf.mxu0
  %v1058 = vadd.f32 %v849, %v1057
  %v1059 = vpop.f32.mrf.mxu0
  %1060 = vdwg.mxu0
  %v1061 = vld [vmem:[%s105] sm:$0xff]
  %v1062 = vld [vmem:[%s105 + $0x8] sm:$0xff]
  %v1063 = vld [vmem:[%s105 + $0x10] sm:$0xff]
  %v1064 = vld [vmem:[%s105 + $0x18] sm:$0xff]
  %v1065 = vld [vmem:[%s105 + $0x20] sm:$0xff]
  %v1066 = vld [vmem:[%s105 + $0x28] sm:$0xff]
  %v1067 = vld [vmem:[%s105 + $0x30] sm:$0xff]
  %v1068 = vld [vmem:[%s105 + $0x38] sm:$0xff]
  %v1069 = vld [vmem:[%s105 + $0x40] sm:$0xff]
  %v1070 = vld [vmem:[%s105 + $0x48] sm:$0xff]
  %v1071 = vld [vmem:[%s105 + $0x50] sm:$0xff]
  %v1072 = vld [vmem:[%s105 + $0x58] sm:$0xff]
  %v1073 = vld [vmem:[%s105 + $0x60] sm:$0xff]
  %v1074 = vld [vmem:[%s105 + $0x68] sm:$0xff]
  %v1075 = vld [vmem:[%s105 + $0x70] sm:$0xff]
  %v1076 = vld [vmem:[%s105 + $0x78] sm:$0xff]
  %v1077 = vld [vmem:[%s105 + $0x80] sm:$0xff]
  %v1078 = vld [vmem:[%s105 + $0x88] sm:$0xff]
  %v1079 = vld [vmem:[%s105 + $0x90] sm:$0xff]
  %v1080 = vld [vmem:[%s105 + $0x98] sm:$0xff]
  %v1081 = vld [vmem:[%s105 + $0xa0] sm:$0xff]
  %v1082 = vld [vmem:[%s105 + $0xa8] sm:$0xff]
  %v1083 = vld [vmem:[%s105 + $0xb0] sm:$0xff]
  %v1084 = vld [vmem:[%s105 + $0xb8] sm:$0xff]
  %v1085 = vld [vmem:[%s105 + $0xc0] sm:$0xff]
  %v1086 = vld [vmem:[%s105 + $0xc8] sm:$0xff]
  %v1087 = vld [vmem:[%s105 + $0xd0] sm:$0xff]
  %v1088 = vld [vmem:[%s105 + $0xd8] sm:$0xff]
  %v1089 = vld [vmem:[%s105 + $0xe0] sm:$0xff]
  %v1090 = vld [vmem:[%s105 + $0xe8] sm:$0xff]
  %v1091 = vld [vmem:[%s105 + $0xf0] sm:$0xff]
  %v1092 = vld [vmem:[%s105 + $0xf8] sm:$0xff]
  %v1093 = vadd.f32 %v935, %v1061
  %v1094 = vadd.f32 %v938, %v1062
  %v1095 = vadd.f32 %v943, %v1063
  %v1096 = vadd.f32 %v946, %v1064
  %v1097 = vadd.f32 %v951, %v1065
  %v1098 = vadd.f32 %v954, %v1066
  %v1099 = vadd.f32 %v959, %v1067
  %v1100 = vadd.f32 %v962, %v1068
  %v1101 = vadd.f32 %v967, %v1069
  %v1102 = vadd.f32 %v970, %v1070
  %v1103 = vadd.f32 %v975, %v1071
  %v1104 = vadd.f32 %v978, %v1072
  %v1105 = vadd.f32 %v983, %v1073
  %v1106 = vadd.f32 %v986, %v1074
  %v1107 = vadd.f32 %v991, %v1075
  %v1108 = vadd.f32 %v994, %v1076
  %v1109 = vadd.f32 %v999, %v1077
  %v1110 = vadd.f32 %v1002, %v1078
  %v1111 = vadd.f32 %v1007, %v1079
  %v1112 = vadd.f32 %v1010, %v1080
  %v1113 = vadd.f32 %v1015, %v1081
  %v1114 = vadd.f32 %v1018, %v1082
  %v1115 = vadd.f32 %v1023, %v1083
  %v1116 = vadd.f32 %v1026, %v1084
  %v1117 = vadd.f32 %v1031, %v1085
  %v1118 = vadd.f32 %v1034, %v1086
  %v1119 = vadd.f32 %v1039, %v1087
  %v1120 = vadd.f32 %v1042, %v1088
  %v1121 = vadd.f32 %v1047, %v1089
  %v1122 = vadd.f32 %v1050, %v1090
  %v1123 = vadd.f32 %v1055, %v1091
  %v1124 = vadd.f32 %v1058, %v1092
  %v1125 = vxor.u32 %v1093, 2147483648
  %v1126 = vxor.u32 %v1094, 2147483648
  %v1127 = vxor.u32 %v1095, 2147483648
  %v1128 = vxor.u32 %v1096, 2147483648
  %v1129 = vxor.u32 %v1097, 2147483648
  %v1130 = vxor.u32 %v1098, 2147483648
  %v1131 = vxor.u32 %v1099, 2147483648
  %v1132 = vxor.u32 %v1100, 2147483648
  %v1133 = vxor.u32 %v1101, 2147483648
  %v1134 = vxor.u32 %v1102, 2147483648
  %v1135 = vxor.u32 %v1103, 2147483648
  %v1136 = vxor.u32 %v1104, 2147483648
  %v1137 = vxor.u32 %v1105, 2147483648
  %v1138 = vxor.u32 %v1106, 2147483648
  %v1139 = vxor.u32 %v1107, 2147483648
  %v1140 = vxor.u32 %v1108, 2147483648
  %v1141 = vxor.u32 %v1109, 2147483648
  %v1142 = vxor.u32 %v1110, 2147483648
  %v1143 = vxor.u32 %v1111, 2147483648
  %v1144 = vxor.u32 %v1112, 2147483648
  %v1145 = vxor.u32 %v1113, 2147483648
  %v1146 = vxor.u32 %v1114, 2147483648
  %v1147 = vxor.u32 %v1115, 2147483648
  %v1148 = vxor.u32 %v1116, 2147483648
  %v1149 = vxor.u32 %v1117, 2147483648
  %v1150 = vxor.u32 %v1118, 2147483648
  %v1151 = vxor.u32 %v1119, 2147483648
  %v1152 = vxor.u32 %v1120, 2147483648
  %v1153 = vxor.u32 %v1121, 2147483648
  %v1154 = vxor.u32 %v1122, 2147483648
  %v1155 = vxor.u32 %v1123, 2147483648
  %v1156 = vxor.u32 %v1124, 2147483648
  %v1157 = vmul.f32 %v1125, 1.442695
  %v1158 = vpow.pop %v1157
  %v1159 = vmul.f32 %v1126, 1.442695
  %v1160 = vpow.pop %v1159
  %v1161 = vmul.f32 %v1127, 1.442695
  %v1162 = vpow.pop %v1161
  %v1163 = vmul.f32 %v1128, 1.442695
  %v1164 = vpow.pop %v1163
  %v1165 = vmul.f32 %v1129, 1.442695
  %v1166 = vpow.pop %v1165
  %v1167 = vmul.f32 %v1130, 1.442695
  %v1168 = vpow.pop %v1167
  %v1169 = vmul.f32 %v1131, 1.442695
  %v1170 = vpow.pop %v1169
  %v1171 = vmul.f32 %v1132, 1.442695
  %v1172 = vpow.pop %v1171
  %v1173 = vmul.f32 %v1133, 1.442695
  %v1174 = vpow.pop %v1173
  %v1175 = vmul.f32 %v1134, 1.442695
  %v1176 = vpow.pop %v1175
  %v1177 = vmul.f32 %v1135, 1.442695
  %v1178 = vpow.pop %v1177
  %v1179 = vmul.f32 %v1136, 1.442695
  %v1180 = vpow.pop %v1179
  %v1181 = vmul.f32 %v1137, 1.442695
  %v1182 = vpow.pop %v1181
  %v1183 = vmul.f32 %v1138, 1.442695
  %v1184 = vpow.pop %v1183
  %v1185 = vmul.f32 %v1139, 1.442695
  %v1186 = vpow.pop %v1185
  %v1187 = vmul.f32 %v1140, 1.442695
  %v1188 = vpow.pop %v1187
  %v1189 = vmul.f32 %v1141, 1.442695
  %v1190 = vpow.pop %v1189
  %v1191 = vmul.f32 %v1142, 1.442695
  %v1192 = vpow.pop %v1191
  %v1193 = vmul.f32 %v1143, 1.442695
  %v1194 = vpow.pop %v1193
  %v1195 = vmul.f32 %v1144, 1.442695
  %v1196 = vpow.pop %v1195
  %v1197 = vmul.f32 %v1145, 1.442695
  %v1198 = vpow.pop %v1197
  %v1199 = vmul.f32 %v1146, 1.442695
  %v1200 = vpow.pop %v1199
  %v1201 = vmul.f32 %v1147, 1.442695
  %v1202 = vpow.pop %v1201
  %v1203 = vmul.f32 %v1148, 1.442695
  %v1204 = vpow.pop %v1203
  %v1205 = vmul.f32 %v1149, 1.442695
  %v1206 = vpow.pop %v1205
  %v1207 = vmul.f32 %v1150, 1.442695
  %v1208 = vpow.pop %v1207
  %v1209 = vmul.f32 %v1151, 1.442695
  %v1210 = vpow.pop %v1209
  %v1211 = vmul.f32 %v1152, 1.442695
  %v1212 = vpow.pop %v1211
  %v1213 = vmul.f32 %v1153, 1.442695
  %v1214 = vpow.pop %v1213
  %v1215 = vmul.f32 %v1154, 1.442695
  %v1216 = vpow.pop %v1215
  %v1217 = vmul.f32 %v1155, 1.442695
  %v1218 = vpow.pop %v1217
  %v1219 = vmul.f32 %v1156, 1.442695
  %v1220 = vpow.pop %v1219
  %v1221 = vadd.f32 %v1158, 1.0
  %v1222 = vadd.f32 %v1160, 1.0
  %v1223 = vadd.f32 %v1162, 1.0
  %v1224 = vadd.f32 %v1164, 1.0
  %v1225 = vadd.f32 %v1166, 1.0
  %v1226 = vadd.f32 %v1168, 1.0
  %v1227 = vadd.f32 %v1170, 1.0
  %v1228 = vadd.f32 %v1172, 1.0
  %v1229 = vadd.f32 %v1174, 1.0
  %v1230 = vadd.f32 %v1176, 1.0
  %v1231 = vadd.f32 %v1178, 1.0
  %v1232 = vadd.f32 %v1180, 1.0
  %v1233 = vadd.f32 %v1182, 1.0
  %v1234 = vadd.f32 %v1184, 1.0
  %v1235 = vadd.f32 %v1186, 1.0
  %v1236 = vadd.f32 %v1188, 1.0
  %v1237 = vadd.f32 %v1190, 1.0
  %v1238 = vadd.f32 %v1192, 1.0
  %v1239 = vadd.f32 %v1194, 1.0
  %v1240 = vadd.f32 %v1196, 1.0
  %v1241 = vadd.f32 %v1198, 1.0
  %v1242 = vadd.f32 %v1200, 1.0
  %v1243 = vadd.f32 %v1202, 1.0
  %v1244 = vadd.f32 %v1204, 1.0
  %v1245 = vadd.f32 %v1206, 1.0
  %v1246 = vadd.f32 %v1208, 1.0
  %v1247 = vadd.f32 %v1210, 1.0
  %v1248 = vadd.f32 %v1212, 1.0
  %v1249 = vadd.f32 %v1214, 1.0
  %v1250 = vadd.f32 %v1216, 1.0
  %v1251 = vadd.f32 %v1218, 1.0
  %v1252 = vadd.f32 %v1220, 1.0
  %v1253 = vrcp.pop %v1221
  %v1254 = vmul.f32 1.0, %v1253
  %v1255 = vrcp.pop %v1222
  %v1256 = vmul.f32 1.0, %v1255
  %v1257 = vrcp.pop %v1223
  %v1258 = vmul.f32 1.0, %v1257
  %v1259 = vrcp.pop %v1224
  %v1260 = vmul.f32 1.0, %v1259
  %v1261 = vrcp.pop %v1225
  %v1262 = vmul.f32 1.0, %v1261
  %v1263 = vrcp.pop %v1226
  %v1264 = vmul.f32 1.0, %v1263
  %v1265 = vrcp.pop %v1227
  %v1266 = vmul.f32 1.0, %v1265
  %v1267 = vrcp.pop %v1228
  %v1268 = vmul.f32 1.0, %v1267
  %v1269 = vrcp.pop %v1229
  %v1270 = vmul.f32 1.0, %v1269
  %v1271 = vrcp.pop %v1230
  %v1272 = vmul.f32 1.0, %v1271
  %v1273 = vrcp.pop %v1231
  %v1274 = vmul.f32 1.0, %v1273
  %v1275 = vrcp.pop %v1232
  %v1276 = vmul.f32 1.0, %v1275
  %v1277 = vrcp.pop %v1233
  %v1278 = vmul.f32 1.0, %v1277
  %v1279 = vrcp.pop %v1234
  %v1280 = vmul.f32 1.0, %v1279
  %v1281 = vrcp.pop %v1235
  %v1282 = vmul.f32 1.0, %v1281
  %v1283 = vrcp.pop %v1236
  %v1284 = vmul.f32 1.0, %v1283
  %v1285 = vrcp.pop %v1237
  %v1286 = vmul.f32 1.0, %v1285
  %v1287 = vrcp.pop %v1238
  %v1288 = vmul.f32 1.0, %v1287
  %v1289 = vrcp.pop %v1239
  %v1290 = vmul.f32 1.0, %v1289
  %v1291 = vrcp.pop %v1240
  %v1292 = vmul.f32 1.0, %v1291
  %v1293 = vrcp.pop %v1241
  %v1294 = vmul.f32 1.0, %v1293
  %v1295 = vrcp.pop %v1242
  %v1296 = vmul.f32 1.0, %v1295
  %v1297 = vrcp.pop %v1243
  %v1298 = vmul.f32 1.0, %v1297
  %v1299 = vrcp.pop %v1244
  %v1300 = vmul.f32 1.0, %v1299
  %v1301 = vrcp.pop %v1245
  %v1302 = vmul.f32 1.0, %v1301
  %v1303 = vrcp.pop %v1246
  %v1304 = vmul.f32 1.0, %v1303
  %v1305 = vrcp.pop %v1247
  %v1306 = vmul.f32 1.0, %v1305
  %v1307 = vrcp.pop %v1248
  %v1308 = vmul.f32 1.0, %v1307
  %v1309 = vrcp.pop %v1249
  %v1310 = vmul.f32 1.0, %v1309
  %v1311 = vrcp.pop %v1250
  %v1312 = vmul.f32 1.0, %v1311
  %v1313 = vrcp.pop %v1251
  %v1314 = vmul.f32 1.0, %v1313
  %v1315 = vrcp.pop %v1252
  %v1316 = vmul.f32 1.0, %v1315
  %vm1317 = vcmp.gt.f32.partialorder %v1093, 0.0
  %vm1318 = vcmp.gt.f32.partialorder %v1094, 0.0
  %vm1319 = vcmp.gt.f32.partialorder %v1095, 0.0
  %vm1320 = vcmp.gt.f32.partialorder %v1096, 0.0
  %vm1321 = vcmp.gt.f32.partialorder %v1097, 0.0
  %vm1322 = vcmp.gt.f32.partialorder %v1098, 0.0
  %vm1323 = vcmp.gt.f32.partialorder %v1099, 0.0
  %vm1324 = vcmp.gt.f32.partialorder %v1100, 0.0
  %vm1325 = vcmp.gt.f32.partialorder %v1101, 0.0
  %vm1326 = vcmp.gt.f32.partialorder %v1102, 0.0
  %vm1327 = vcmp.gt.f32.partialorder %v1103, 0.0
  %vm1328 = vcmp.gt.f32.partialorder %v1104, 0.0
  %vm1329 = vcmp.gt.f32.partialorder %v1105, 0.0
  %vm1330 = vcmp.gt.f32.partialorder %v1106, 0.0
  %vm1331 = vcmp.gt.f32.partialorder %v1107, 0.0
  %vm1332 = vcmp.gt.f32.partialorder %v1108, 0.0
  %vm1333 = vcmp.gt.f32.partialorder %v1109, 0.0
  %vm1334 = vcmp.gt.f32.partialorder %v1110, 0.0
  %vm1335 = vcmp.gt.f32.partialorder %v1111, 0.0
  %vm1336 = vcmp.gt.f32.partialorder %v1112, 0.0
  %vm1337 = vcmp.gt.f32.partialorder %v1113, 0.0
  %vm1338 = vcmp.gt.f32.partialorder %v1114, 0.0
  %vm1339 = vcmp.gt.f32.partialorder %v1115, 0.0
  %vm1340 = vcmp.gt.f32.partialorder %v1116, 0.0
  %vm1341 = vcmp.gt.f32.partialorder %v1117, 0.0
  %vm1342 = vcmp.gt.f32.partialorder %v1118, 0.0
  %vm1343 = vcmp.gt.f32.partialorder %v1119, 0.0
  %vm1344 = vcmp.gt.f32.partialorder %v1120, 0.0
  %vm1345 = vcmp.gt.f32.partialorder %v1121, 0.0
  %vm1346 = vcmp.gt.f32.partialorder %v1122, 0.0
  %vm1347 = vcmp.gt.f32.partialorder %v1123, 0.0
  %vm1348 = vcmp.gt.f32.partialorder %v1124, 0.0
  %v1349 = vmul.f32 %v1093, 0.01
  %v1350 = vmul.f32 %v1094, 0.01
  %v1351 = vmul.f32 %v1095, 0.01
  %v1352 = vmul.f32 %v1096, 0.01
  %v1353 = vmul.f32 %v1097, 0.01
  %v1354 = vmul.f32 %v1098, 0.01
  %v1355 = vmul.f32 %v1099, 0.01
  %v1356 = vmul.f32 %v1100, 0.01
  %v1357 = vmul.f32 %v1101, 0.01
  %v1358 = vmul.f32 %v1102, 0.01
  %v1359 = vmul.f32 %v1103, 0.01
  %v1360 = vmul.f32 %v1104, 0.01
  %v1361 = vmul.f32 %v1105, 0.01
  %v1362 = vmul.f32 %v1106, 0.01
  %v1363 = vmul.f32 %v1107, 0.01
  %v1364 = vmul.f32 %v1108, 0.01
  %v1365 = vmul.f32 %v1109, 0.01
  %v1366 = vmul.f32 %v1110, 0.01
  %v1367 = vmul.f32 %v1111, 0.01
  %v1368 = vmul.f32 %v1112, 0.01
  %v1369 = vmul.f32 %v1113, 0.01
  %v1370 = vmul.f32 %v1114, 0.01
  %v1371 = vmul.f32 %v1115, 0.01
  %v1372 = vmul.f32 %v1116, 0.01
  %v1373 = vmul.f32 %v1117, 0.01
  %v1374 = vmul.f32 %v1118, 0.01
  %v1375 = vmul.f32 %v1119, 0.01
  %v1376 = vmul.f32 %v1120, 0.01
  %v1377 = vmul.f32 %v1121, 0.01
  %v1378 = vmul.f32 %v1122, 0.01
  %v1379 = vmul.f32 %v1123, 0.01
  %v1380 = vmul.f32 %v1124, 0.01
  %v1381 = vsel %vm1317, %v1093, %v1349
  %v1382 = vsel %vm1318, %v1094, %v1350
  %v1383 = vsel %vm1319, %v1095, %v1351
  %v1384 = vsel %vm1320, %v1096, %v1352
  %v1385 = vsel %vm1321, %v1097, %v1353
  %v1386 = vsel %vm1322, %v1098, %v1354
  %v1387 = vsel %vm1323, %v1099, %v1355
  %v1388 = vsel %vm1324, %v1100, %v1356
  %v1389 = vsel %vm1325, %v1101, %v1357
  %v1390 = vsel %vm1326, %v1102, %v1358
  %v1391 = vsel %vm1327, %v1103, %v1359
  %v1392 = vsel %vm1328, %v1104, %v1360
  %v1393 = vsel %vm1329, %v1105, %v1361
  %v1394 = vsel %vm1330, %v1106, %v1362
  %v1395 = vsel %vm1331, %v1107, %v1363
  %v1396 = vsel %vm1332, %v1108, %v1364
  %v1397 = vsel %vm1333, %v1109, %v1365
  %v1398 = vsel %vm1334, %v1110, %v1366
  %v1399 = vsel %vm1335, %v1111, %v1367
  %v1400 = vsel %vm1336, %v1112, %v1368
  %v1401 = vsel %vm1337, %v1113, %v1369
  %v1402 = vsel %vm1338, %v1114, %v1370
  %v1403 = vsel %vm1339, %v1115, %v1371
  %v1404 = vsel %vm1340, %v1116, %v1372
  %v1405 = vsel %vm1341, %v1117, %v1373
  %v1406 = vsel %vm1342, %v1118, %v1374
  %v1407 = vsel %vm1343, %v1119, %v1375
  %v1408 = vsel %vm1344, %v1120, %v1376
  %v1409 = vsel %vm1345, %v1121, %v1377
  %v1410 = vsel %vm1346, %v1122, %v1378
  %v1411 = vsel %vm1347, %v1123, %v1379
  %v1412 = vsel %vm1348, %v1124, %v1380
  %v1413 = vmul.f32 %v1254, %v1381
  %v1414 = vmul.f32 %v1256, %v1382
  %v1415 = vmul.f32 %v1258, %v1383
  %v1416 = vmul.f32 %v1260, %v1384
  %v1417 = vmul.f32 %v1262, %v1385
  %v1418 = vmul.f32 %v1264, %v1386
  %v1419 = vmul.f32 %v1266, %v1387
  %v1420 = vmul.f32 %v1268, %v1388
  %v1421 = vmul.f32 %v1270, %v1389
  %v1422 = vmul.f32 %v1272, %v1390
  %v1423 = vmul.f32 %v1274, %v1391
  %v1424 = vmul.f32 %v1276, %v1392
  %v1425 = vmul.f32 %v1278, %v1393
  %v1426 = vmul.f32 %v1280, %v1394
  %v1427 = vmul.f32 %v1282, %v1395
  %v1428 = vmul.f32 %v1284, %v1396
  %v1429 = vmul.f32 %v1286, %v1397
  %v1430 = vmul.f32 %v1288, %v1398
  %v1431 = vmul.f32 %v1290, %v1399
  %v1432 = vmul.f32 %v1292, %v1400
  %v1433 = vmul.f32 %v1294, %v1401
  %v1434 = vmul.f32 %v1296, %v1402
  %v1435 = vmul.f32 %v1298, %v1403
  %v1436 = vmul.f32 %v1300, %v1404
  %v1437 = vmul.f32 %v1302, %v1405
  %v1438 = vmul.f32 %v1304, %v1406
  %v1439 = vmul.f32 %v1306, %v1407
  %v1440 = vmul.f32 %v1308, %v1408
  %v1441 = vmul.f32 %v1310, %v1409
  %v1442 = vmul.f32 %v1312, %v1410
  %v1443 = vmul.f32 %v1314, %v1411
  %v1444 = vmul.f32 %v1316, %v1412
  %v1445 = vpack.c.bf16 %v1414, %v1413
  %v1446 = vpack.c.bf16 %v1416, %v1415
  %v1447 = vpack.c.bf16 %v1418, %v1417
  %v1448 = vpack.c.bf16 %v1420, %v1419
  %v1449 = vpack.c.bf16 %v1422, %v1421
  %v1450 = vpack.c.bf16 %v1424, %v1423
  %v1451 = vpack.c.bf16 %v1426, %v1425
  %v1452 = vpack.c.bf16 %v1428, %v1427
  %v1453 = vpack.c.bf16 %v1430, %v1429
  %v1454 = vpack.c.bf16 %v1432, %v1431
  %v1455 = vpack.c.bf16 %v1434, %v1433
  %v1456 = vpack.c.bf16 %v1436, %v1435
  %v1457 = vpack.c.bf16 %v1438, %v1437
  %v1458 = vpack.c.bf16 %v1440, %v1439
  %v1459 = vpack.c.bf16 %v1442, %v1441
  %v1460 = vpack.c.bf16 %v1444, %v1443
  %v1461 = vlaneseq
  %v1462 = vshrl.u32 %v1461, 7
  %v1463 = vadd.s32 %v1462, 8
  %v1464 = vadd.s32 %v1462, 16
  %v1465 = vadd.s32 %v1462, 24
  %v1466 = vadd.s32 %v1462, 32
  %v1467 = vadd.s32 %v1462, 40
  %v1468 = vadd.s32 %v1462, 48
  %v1469 = vadd.s32 %v1462, 56
  %v1470 = vadd.s32 %v1462, 64
  %v1471 = vadd.s32 %v1462, 72
  %v1472 = vadd.s32 %v1462, 80
  %v1473 = vadd.s32 %v1462, 88
  %v1474 = vadd.s32 %v1462, 96
  %v1475 = vadd.s32 %v1462, 104
  %v1476 = vadd.s32 %v1462, 112
  %v1477 = vadd.s32 %v1462, 120
  %v1478 = vld [vmem:[%s97] sm:$0x3]
  %v1479 = vlaneseq
  %v1480 = vshrl.u32 %v1479, 7
  %v1481 = vsub.s32 0, %v1480
  %v1482 = vrot.slane %v1478, %v1481
  %v1483 = vlaneseq
  %v1484 = vshrl.u32 %v1483, 7
  %v1485 = vsub.s32 1, %v1484
  %v1486 = vrot.slane %v1478, %v1485
  %vm1487 = vcmp.eq.s32.totalorder %v1482, %v1462
  %vm1488 = vcmp.eq.s32.totalorder %v1486, %v1462
  %vm1489 = vcmp.eq.s32.totalorder %v1482, %v1463
  %vm1490 = vcmp.eq.s32.totalorder %v1486, %v1463
  %vm1491 = vcmp.eq.s32.totalorder %v1482, %v1464
  %vm1492 = vcmp.eq.s32.totalorder %v1486, %v1464
  %vm1493 = vcmp.eq.s32.totalorder %v1482, %v1465
  %vm1494 = vcmp.eq.s32.totalorder %v1486, %v1465
  %vm1495 = vcmp.eq.s32.totalorder %v1482, %v1466
  %vm1496 = vcmp.eq.s32.totalorder %v1486, %v1466
  %vm1497 = vcmp.eq.s32.totalorder %v1482, %v1467
  %vm1498 = vcmp.eq.s32.totalorder %v1486, %v1467
  %vm1499 = vcmp.eq.s32.totalorder %v1482, %v1468
  %vm1500 = vcmp.eq.s32.totalorder %v1486, %v1468
  %vm1501 = vcmp.eq.s32.totalorder %v1482, %v1469
  %vm1502 = vcmp.eq.s32.totalorder %v1486, %v1469
  %vm1503 = vcmp.eq.s32.totalorder %v1482, %v1470
  %vm1504 = vcmp.eq.s32.totalorder %v1486, %v1470
  %vm1505 = vcmp.eq.s32.totalorder %v1482, %v1471
  %vm1506 = vcmp.eq.s32.totalorder %v1486, %v1471
  %vm1507 = vcmp.eq.s32.totalorder %v1482, %v1472
  %vm1508 = vcmp.eq.s32.totalorder %v1486, %v1472
  %vm1509 = vcmp.eq.s32.totalorder %v1482, %v1473
  %vm1510 = vcmp.eq.s32.totalorder %v1486, %v1473
  %vm1511 = vcmp.eq.s32.totalorder %v1482, %v1474
  %vm1512 = vcmp.eq.s32.totalorder %v1486, %v1474
  %vm1513 = vcmp.eq.s32.totalorder %v1482, %v1475
  %vm1514 = vcmp.eq.s32.totalorder %v1486, %v1475
  %vm1515 = vcmp.eq.s32.totalorder %v1482, %v1476
  %vm1516 = vcmp.eq.s32.totalorder %v1486, %v1476
  %vm1517 = vcmp.eq.s32.totalorder %v1482, %v1477
  %vm1518 = vcmp.eq.s32.totalorder %v1486, %v1477
  %v1519 = vsel %vm1487, 1, 0
  %v1520 = vsel %vm1488, 1, 0
  %v1521 = vsel %vm1489, 1, 0
  %v1522 = vsel %vm1490, 1, 0
  %v1523 = vsel %vm1491, 1, 0
  %v1524 = vsel %vm1492, 1, 0
  %v1525 = vsel %vm1493, 1, 0
  %v1526 = vsel %vm1494, 1, 0
  %v1527 = vsel %vm1495, 1, 0
  %v1528 = vsel %vm1496, 1, 0
  %v1529 = vsel %vm1497, 1, 0
  %v1530 = vsel %vm1498, 1, 0
  %v1531 = vsel %vm1499, 1, 0
  %v1532 = vsel %vm1500, 1, 0
  %v1533 = vsel %vm1501, 1, 0
  %v1534 = vsel %vm1502, 1, 0
  %v1535 = vsel %vm1503, 1, 0
  %v1536 = vsel %vm1504, 1, 0
  %v1537 = vsel %vm1505, 1, 0
  %v1538 = vsel %vm1506, 1, 0
  %v1539 = vsel %vm1507, 1, 0
  %v1540 = vsel %vm1508, 1, 0
  %v1541 = vsel %vm1509, 1, 0
  %v1542 = vsel %vm1510, 1, 0
  %v1543 = vsel %vm1511, 1, 0
  %v1544 = vsel %vm1512, 1, 0
  %v1545 = vsel %vm1513, 1, 0
  %v1546 = vsel %vm1514, 1, 0
  %v1547 = vsel %vm1515, 1, 0
  %v1548 = vsel %vm1516, 1, 0
  %v1549 = vsel %vm1517, 1, 0
  %v1550 = vsel %vm1518, 1, 0
  %v1551 = vcvt.s32.f32 %v1519
  %v1552 = vcvt.s32.f32 %v1520
  %v1553 = vcvt.s32.f32 %v1521
  %v1554 = vcvt.s32.f32 %v1522
  %v1555 = vcvt.s32.f32 %v1523
  %v1556 = vcvt.s32.f32 %v1524
  %v1557 = vcvt.s32.f32 %v1525
  %v1558 = vcvt.s32.f32 %v1526
  %v1559 = vcvt.s32.f32 %v1527
  %v1560 = vcvt.s32.f32 %v1528
  %v1561 = vcvt.s32.f32 %v1529
  %v1562 = vcvt.s32.f32 %v1530
  %v1563 = vcvt.s32.f32 %v1531
  %v1564 = vcvt.s32.f32 %v1532
  %v1565 = vcvt.s32.f32 %v1533
  %v1566 = vcvt.s32.f32 %v1534
  %v1567 = vcvt.s32.f32 %v1535
  %v1568 = vcvt.s32.f32 %v1536
  %v1569 = vcvt.s32.f32 %v1537
  %v1570 = vcvt.s32.f32 %v1538
  %v1571 = vcvt.s32.f32 %v1539
  %v1572 = vcvt.s32.f32 %v1540
  %v1573 = vcvt.s32.f32 %v1541
  %v1574 = vcvt.s32.f32 %v1542
  %v1575 = vcvt.s32.f32 %v1543
  %v1576 = vcvt.s32.f32 %v1544
  %v1577 = vcvt.s32.f32 %v1545
  %v1578 = vcvt.s32.f32 %v1546
  %v1579 = vcvt.s32.f32 %v1547
  %v1580 = vcvt.s32.f32 %v1548
  %v1581 = vcvt.s32.f32 %v1549
  %v1582 = vcvt.s32.f32 %v1550
  %v1583 = vpack.c.bf16 %v1553, %v1551
  %v1584 = vpack.c.bf16 %v1554, %v1552
  %v1585 = vpack.c.bf16 %v1557, %v1555
  %v1586 = vpack.c.bf16 %v1558, %v1556
  %v1587 = vpack.c.bf16 %v1561, %v1559
  %v1588 = vpack.c.bf16 %v1562, %v1560
  %v1589 = vpack.c.bf16 %v1565, %v1563
  %v1590 = vpack.c.bf16 %v1566, %v1564
  %v1591 = vpack.c.bf16 %v1569, %v1567
  %v1592 = vpack.c.bf16 %v1570, %v1568
  %v1593 = vpack.c.bf16 %v1573, %v1571
  %v1594 = vpack.c.bf16 %v1574, %v1572
  %v1595 = vpack.c.bf16 %v1577, %v1575
  %v1596 = vpack.c.bf16 %v1578, %v1576
  %v1597 = vpack.c.bf16 %v1581, %v1579
  %v1598 = vpack.c.bf16 %v1582, %v1580
  %v1599 = vld [vmem:[%s6] sm:$0xff]
  %v1600 = vld [vmem:[%s6 + $0x8] sm:$0xff]
  %v1601 = vld [vmem:[%s6 + $0x10] sm:$0xff]
  %v1602 = vld [vmem:[%s6 + $0x18] sm:$0xff]
  %v1603 = vld [vmem:[%s6 + $0x20] sm:$0xff]
  %v1604 = vld [vmem:[%s6 + $0x28] sm:$0xff]
  %v1605 = vld [vmem:[%s6 + $0x30] sm:$0xff]
  %v1606 = vld [vmem:[%s6 + $0x38] sm:$0xff]
  %v1607 = vld [vmem:[%s6 + $0x40] sm:$0xff]
  %v1608 = vld [vmem:[%s6 + $0x48] sm:$0xff]
  %v1609 = vld [vmem:[%s6 + $0x50] sm:$0xff]
  %v1610 = vld [vmem:[%s6 + $0x58] sm:$0xff]
  %v1611 = vld [vmem:[%s6 + $0x60] sm:$0xff]
  %v1612 = vld [vmem:[%s6 + $0x68] sm:$0xff]
  %v1613 = vld [vmem:[%s6 + $0x70] sm:$0xff]
  %v1614 = vld [vmem:[%s6 + $0x78] sm:$0xff]
  %1615 = vmatprep.subr.bf16.mxu0 0
  %1616 = vmatpush1.bf16.msra.mxu0 %v1452
  %1617 = vmatprep.subr.bf16.mxu0 0
  %1618 = vmatpush1.bf16.msra.mxu0 %v1451
  %1619 = vmatprep.subr.bf16.mxu0 0
  %1620 = vmatpush1.bf16.msra.mxu0 %v1450
  %1621 = vmatprep.subr.bf16.mxu0 0
  %1622 = vmatpush1.bf16.msra.mxu0 %v1449
  %1623 = vmatprep.subr.bf16.mxu0 0
  %1624 = vmatpush1.bf16.msra.mxu0 %v1448
  %1625 = vmatprep.subr.bf16.mxu0 0
  %1626 = vmatpush1.bf16.msra.mxu0 %v1447
  %1627 = vmatprep.subr.bf16.mxu0 0
  %1628 = vmatpush1.bf16.msra.mxu0 %v1446
  %1629 = vmatprep.subr.bf16.mxu0 0
  %1630 = vmatpush1.bf16.msra.mxu0 %v1445
  %1631 = vmatprep.subr.bf16.mxu0 0
  %1632 = vmatpush2.bf16.msra.mxu0 %v1460
  %1633 = vmatprep.subr.bf16.mxu0 0
  %1634 = vmatpush2.bf16.msra.mxu0 %v1459
  %1635 = vmatprep.subr.bf16.mxu0 0
  %1636 = vmatpush2.bf16.msra.mxu0 %v1458
  %1637 = vmatprep.subr.bf16.mxu0 0
  %1638 = vmatpush2.bf16.msra.mxu0 %v1457
  %1639 = vmatprep.subr.bf16.mxu0 0
  %1640 = vmatpush2.bf16.msra.mxu0 %v1456
  %1641 = vmatprep.subr.bf16.mxu0 0
  %1642 = vmatpush2.bf16.msra.mxu0 %v1455
  %1643 = vmatprep.subr.bf16.mxu0 0
  %1644 = vmatpush2.bf16.msra.mxu0 %v1454
  %1645 = vmatprep.subr.bf16.mxu0 0
  %1646 = vmatpush2.bf16.msra.mxu0 %v1453
  %1647 = vmatprep.mubr.bf16.mxu0 %v1584
  %1648 = vmatmul.mubr.bf16.gmra.mxu0 %v1583
  %v1649 = vpop.f32.mrf.mxu0
  %v1650 = vadd.f32 0.0, %v1649
  %v1651 = vpop.f32.mrf.mxu0
  %v1652 = vpop.f32.mrf.mxu0
  %v1653 = vadd.f32 0.0, %v1652
  %v1654 = vpop.f32.mrf.mxu0
  %1655 = vmatprep.mubr.bf16.mxu0 %v1586
  %1656 = vmatmul.mubr.bf16.gmra.mxu0 %v1585
  %v1657 = vpop.f32.mrf.mxu0
  %v1658 = vadd.f32 0.0, %v1657
  %v1659 = vpop.f32.mrf.mxu0
  %v1660 = vpop.f32.mrf.mxu0
  %v1661 = vadd.f32 0.0, %v1660
  %v1662 = vpop.f32.mrf.mxu0
  %1663 = vmatprep.mubr.bf16.mxu0 %v1588
  %1664 = vmatmul.mubr.bf16.gmra.mxu0 %v1587
  %v1665 = vpop.f32.mrf.mxu0
  %v1666 = vadd.f32 0.0, %v1665
  %v1667 = vpop.f32.mrf.mxu0
  %v1668 = vpop.f32.mrf.mxu0
  %v1669 = vadd.f32 0.0, %v1668
  %v1670 = vpop.f32.mrf.mxu0
  %1671 = vmatprep.mubr.bf16.mxu0 %v1590
  %1672 = vmatmul.mubr.bf16.gmra.mxu0 %v1589
  %v1673 = vpop.f32.mrf.mxu0
  %v1674 = vadd.f32 0.0, %v1673
  %v1675 = vpop.f32.mrf.mxu0
  %v1676 = vpop.f32.mrf.mxu0
  %v1677 = vadd.f32 0.0, %v1676
  %v1678 = vpop.f32.mrf.mxu0
  %1679 = vmatprep.mubr.bf16.mxu0 %v1592
  %1680 = vmatmul.mubr.bf16.gmra.mxu0 %v1591
  %v1681 = vpop.f32.mrf.mxu0
  %v1682 = vadd.f32 0.0, %v1681
  %v1683 = vpop.f32.mrf.mxu0
  %v1684 = vpop.f32.mrf.mxu0
  %v1685 = vadd.f32 0.0, %v1684
  %v1686 = vpop.f32.mrf.mxu0
  %1687 = vmatprep.mubr.bf16.mxu0 %v1594
  %1688 = vmatmul.mubr.bf16.gmra.mxu0 %v1593
  %v1689 = vpop.f32.mrf.mxu0
  %v1690 = vadd.f32 0.0, %v1689
  %v1691 = vpop.f32.mrf.mxu0
  %v1692 = vpop.f32.mrf.mxu0
  %v1693 = vadd.f32 0.0, %v1692
  %v1694 = vpop.f32.mrf.mxu0
  %1695 = vmatprep.mubr.bf16.mxu0 %v1596
  %1696 = vmatmul.mubr.bf16.gmra.mxu0 %v1595
  %v1697 = vpop.f32.mrf.mxu0
  %v1698 = vadd.f32 0.0, %v1697
  %v1699 = vpop.f32.mrf.mxu0
  %v1700 = vpop.f32.mrf.mxu0
  %v1701 = vadd.f32 0.0, %v1700
  %v1702 = vpop.f32.mrf.mxu0
  %1703 = vmatprep.mubr.bf16.mxu0 %v1598
  %1704 = vmatmul.mubr.bf16.gmra.mxu0 %v1597
  %v1705 = vpop.f32.mrf.mxu0
  %v1706 = vadd.f32 0.0, %v1705
  %v1707 = vpop.f32.mrf.mxu0
  %v1708 = vpop.f32.mrf.mxu0
  %v1709 = vadd.f32 0.0, %v1708
  %v1710 = vpop.f32.mrf.mxu0
  %1711 = vdwg.mxu0
  %v1712 = vadd.f32 %v1599, %v1650
  %v1713 = vadd.f32 %v1600, %v1653
  %v1714 = vadd.f32 %v1601, %v1658
  %v1715 = vadd.f32 %v1602, %v1661
  %v1716 = vadd.f32 %v1603, %v1666
  %v1717 = vadd.f32 %v1604, %v1669
  %v1718 = vadd.f32 %v1605, %v1674
  %v1719 = vadd.f32 %v1606, %v1677
  %v1720 = vadd.f32 %v1607, %v1682
  %v1721 = vadd.f32 %v1608, %v1685
  %v1722 = vadd.f32 %v1609, %v1690
  %v1723 = vadd.f32 %v1610, %v1693
  %v1724 = vadd.f32 %v1611, %v1698
  %v1725 = vadd.f32 %v1612, %v1701
  %v1726 = vadd.f32 %v1613, %v1706
  %v1727 = vadd.f32 %v1614, %v1709
  %1728 = vst [vmem:[%s6] sm:$0xff] %v1712
  %1729 = vst [vmem:[%s6 + $0x8] sm:$0xff] %v1713
  %1730 = vst [vmem:[%s6 + $0x10] sm:$0xff] %v1714
  %1731 = vst [vmem:[%s6 + $0x18] sm:$0xff] %v1715
  %1732 = vst [vmem:[%s6 + $0x20] sm:$0xff] %v1716
  %1733 = vst [vmem:[%s6 + $0x28] sm:$0xff] %v1717
  %1734 = vst [vmem:[%s6 + $0x30] sm:$0xff] %v1718
  %1735 = vst [vmem:[%s6 + $0x38] sm:$0xff] %v1719
  %1736 = vst [vmem:[%s6 + $0x40] sm:$0xff] %v1720
  %1737 = vst [vmem:[%s6 + $0x48] sm:$0xff] %v1721
  %1738 = vst [vmem:[%s6 + $0x50] sm:$0xff] %v1722
  %1739 = vst [vmem:[%s6 + $0x58] sm:$0xff] %v1723
  %1740 = vst [vmem:[%s6 + $0x60] sm:$0xff] %v1724
  %1741 = vst [vmem:[%s6 + $0x68] sm:$0xff] %v1725
  %1742 = vst [vmem:[%s6 + $0x70] sm:$0xff] %v1726
  %1743 = vst [vmem:[%s6 + $0x78] sm:$0xff] %v1727
  // Predicated region
  $region30: #{cg_forward.1} parent=0 // pred_check
    _
  $region31: #{cg_forward.1} parent=0 // pred_check_branch
    %1745 = sbr.rel (0) target = $region33
  $region32: #{cg_forward.1} parent=0 // pred_region
    _
  $region33: #{cg_forward.1} parent=0 // pred_fallthru
    _
  // Predicated region
  $region34: #{cg_forward.1} parent=0 // pred_check
    _
  $region35: #{cg_forward.1} parent=0 // pred_check_branch
    %1747 = sbr.rel (0) target = $region37
  $region36: #{cg_forward.1} parent=0 // pred_region
    _
  $region37: #{cg_forward.1} parent=0 // pred_fallthru
    _

</llo_original>
